<compile_context>
chip_gen: v7x
topology: tpu7x:2x2x1
jax: 0.10.0
libtpu: 0.0.40
codegen_flags: <defaults>
</compile_context>

<pallas_src>
import jax
import jax.numpy as jnp
import numpy as np
from jax.experimental import pallas as pl
from jax.experimental.pallas import tpu as pltpu

RECEPTIVE_FIELD = 45                                  # sum([(2-1)*2**l for l in range(4)]) * 3
DILATIONS = tuple([2 ** l for l in range(4)] * 3)     # 12 residual blocks: [1,2,4,8] x 3


def wavenet_classifier_kernel(x_ref, wc_ref, wd0_ref, wd1_ref, wres_ref, bres_ref,
                              wskip_ref, bskip_ref, wdense_ref, wlin_ref, blin_ref,
                              out_ref):
    TB, L = x_ref.shape

    # Lane-position iota, hoisted once and reused by every mask below.
    pos = jax.lax.broadcasted_iota(jnp.int32, (TB, L), 1)

    def shifted(a, d):
        # a[:, p - d] for p >= d else 0: the left tap of
        # Conv1d(k=2, padding=1, dilation=d)(x)[..., :-1] with every array kept at
        # full length L.  pltpu.roll keeps the shift on the XLU instead of
        # lane-slice / concat relayout copies.
        return jnp.where(pos >= d, pltpu.roll(a, d, axis=1), 0.0)

    def gate(c):
        # tanh(c) * sigmoid(c) with a single EUP transcendental:
        #   v = exp(-|c|);  result = (1 - v) / (1 + v^2) * (1 if c >= 0 else -v)
        v = jnp.exp(-jnp.abs(c))
        denom = 1.0 + v * v
        r = pl.reciprocal(denom, approx=True)
        r = r * (2.0 - denom * r)                     # one Newton step (VPU) -> ~f32 exact
        return (1.0 - v) * jnp.where(c >= 0, 1.0, -v) * r

    x = x_ref[...]

    # WaveNet.casualConv1d: Conv1d(1,1,k=2,dilation=1,padding=1,bias=False)(x)[..., :-1]
    cur = wc_ref[0] * shifted(x, 1) + wc_ref[1] * x
    cur_len = L

    # StackResidualBlock: 12 residual blocks, dilations statically known -> unrolled.
    skip_sum = jnp.zeros((TB, L), jnp.float32)
    for i, d in enumerate(DILATIONS):
        out_len = cur_len + 1 - d                     # static valid length
        start = L - out_len                           # static first valid position
        conv = wd0_ref[i] * shifted(cur, d) + wd1_ref[i] * cur
        gated = gate(conv)
        # skipConv1d (1x1 + bias); only the last (L-45) lanes are read at the end.
        skip_sum = skip_sum + (wskip_ref[i] * gated + bskip_ref[i])
        # resConv1d (1x1 + bias) + input_cut (same lane position once right-aligned)
        res = wres_ref[i] * gated + bres_ref[i] + cur
        if start > 0 and i + 1 < len(DILATIONS):
            # Keep the invalid prefix exactly zero so the next block's first valid
            # sample reads the Conv1d padding zero through its rolled left tap.
            res = jnp.where(pos >= start, res, 0.0)
        cur = res
        cur_len = out_len

    # DenseLayer: relu -> 1x1 conv (no bias) -> relu -> 1x1 conv (no bias)
    #             -> softmax over the size-1 channel dim (identically 1; NaN/Inf
    #             still propagate).  Junk lanes (< receptive field) are zeroed.
    y = jnp.maximum(skip_sum, 0.0)
    y = wdense_ref[0] * y
    y = jnp.maximum(y, 0.0)
    y = wdense_ref[1] * y
    y = jnp.where(pos >= RECEPTIVE_FIELD, y * 0.0 + 1.0, 0.0)

    # nn.Linear(seqLen-45, output_size) folded into a length-L matrix whose first
    # 45 rows are zero -> no lane suffix-slice needed; the output block is
    # lane-dense (columns padded to a multiple of 128).
    out = jnp.dot(y, wlin_ref[...], preferred_element_type=jnp.float32)
    out_ref[...] = out + blin_ref[...]


def _vmem_limit_bytes():
    cap = 64 * 1024 * 1024            # assume the smallest (v7x) if the query fails
    try:
        cap = int(getattr(pltpu.get_tpu_info(), "vmem_capacity_bytes", cap))
    except Exception:
        pass
    # Leave headroom for compiler scratch: 128 MiB parts -> 112 MiB, v7x -> 48 MiB.
    return int(min(max(cap - 16 * 1024 * 1024, 32 * 1024 * 1024), 112 * 1024 * 1024))


def _choose_tile_b(B, L):
    # ~a dozen live f32 length-L rows per batch row inside the unrolled 12 blocks,
    # plus double-buffered input tiles; keep the tile well under the smallest
    # usable VMEM (v7x) so the same tile works on every generation.
    budget = 24 * 1024 * 1024
    per_row = 14 * L * 4
    cap = max(8, (budget // per_row) // 8 * 8)
    return int(max(8, min(256, cap, ((B + 7) // 8) * 8)))


def _f32(a):
    return jnp.asarray(a, jnp.float32)


@jax.jit
def wavenet_classifier_forward(x, params):
    B, C, L = x.shape
    assert C == 1, "WaveNet is built with in_channels == 1"
    assert L > RECEPTIVE_FIELD, "seqLen must exceed the receptive field (45)"
    T = L - RECEPTIVE_FIELD
    output_size = params["w_lin"].shape[0]
    out_pad = ((output_size + 127) // 128) * 128      # lane-dense output block

    x2d = x.reshape(B, L).astype(jnp.float32)
    tile_b = _choose_tile_b(B, L)
    b_pad = ((B + tile_b - 1) // tile_b) * tile_b
    if b_pad != B:
        x2d = jnp.pad(x2d, ((0, b_pad - B), (0, 0)))

    # Fold the Linear into a zero-prefixed (L, out_pad) matrix + padded bias.
    w_lin_pad = jnp.zeros((L, out_pad), jnp.float32)
    w_lin_pad = w_lin_pad.at[L - T:, :output_size].set(_f32(params["w_lin"]).T)
    b_lin_pad = jnp.zeros((1, out_pad), jnp.float32)
    b_lin_pad = b_lin_pad.at[0, :output_size].set(_f32(params["b_lin"]))

    smem = pl.BlockSpec(memory_space=pltpu.MemorySpace.SMEM)
    grid = (b_pad // tile_b,)

    out2d = pl.pallas_call(
        wavenet_classifier_kernel,
        out_shape=jax.ShapeDtypeStruct((b_pad, out_pad), jnp.float32),
        grid=grid,
        in_specs=[pl.BlockSpec((tile_b, L), lambda b: (b, 0)),       # x tile
                  smem, smem, smem,                                  # causal/dilated taps
                  smem, smem, smem, smem,                            # res/skip 1x1 convs
                  smem,                                              # dense 1x1 convs
                  pl.BlockSpec((L, out_pad), lambda b: (0, 0)),      # folded Linear W
                  pl.BlockSpec((1, out_pad), lambda b: (0, 0))],     # Linear bias
        out_specs=pl.BlockSpec((tile_b, out_pad), lambda b: (b, 0)),
        compiler_params=pltpu.CompilerParams(
            dimension_semantics=("parallel",),
            vmem_limit_bytes=_vmem_limit_bytes()),
    )(x2d, _f32(params["w_causal"]), _f32(params["w_dil0"]), _f32(params["w_dil1"]),
      _f32(params["w_res"]), _f32(params["b_res"]), _f32(params["w_skip"]),
      _f32(params["b_skip"]), _f32(params["w_dense"]), w_lin_pad, b_lin_pad)

    return out2d[:B, :output_size].reshape(B, 1, output_size)


def init_params(key, seq_len, output_size):
    T = seq_len - RECEPTIVE_FIELD
    ks = jax.random.split(key, 10)
    f32 = jnp.float32
    return dict(
        w_causal=jax.random.normal(ks[0], (2,), f32) * 0.5,          # Conv1d(1,1,2) no bias
        w_dil0=jax.random.normal(ks[1], (12,), f32) * 0.5,           # dilated conv tap 0
        w_dil1=jax.random.normal(ks[2], (12,), f32) * 0.5,           # dilated conv tap 1
        w_res=jax.random.normal(ks[3], (12,), f32) * 0.5,            # resConv1d 1x1 weight
        b_res=jax.random.normal(ks[4], (12,), f32) * 0.1,            # resConv1d bias
        w_skip=jax.random.normal(ks[5], (12,), f32) * 0.5,           # skipConv1d 1x1 weight
        b_skip=jax.random.normal(ks[6], (12,), f32) * 0.1,           # skipConv1d bias
        w_dense=jax.random.normal(ks[7], (2,), f32) * 0.5,           # dense conv1d/conv2d 1x1
        w_lin=jax.random.normal(ks[8], (output_size, T), f32) * 0.1, # nn.Linear weight
        b_lin=jax.random.normal(ks[9], (output_size,), f32) * 0.1,   # nn.Linear bias
    )


def reference_forward(x, params):
    """Pure-JAX reference of the intended semantics (ground truth for the check)."""
    B, C, L = x.shape
    T = L - RECEPTIVE_FIELD
    xv = x.reshape(B, L).astype(jnp.float32)

    def cconv(a, w0, w1, d):
        Lc = a.shape[1]
        left = jnp.concatenate([jnp.zeros((B, 1), a.dtype), a[:, :Lc - d]], axis=1)
        return w0 * left + w1 * a[:, d - 1:Lc]

    cur = cconv(xv, params["w_causal"][0], params["w_causal"][1], 1)
    skip_sum = jnp.zeros((B, T), jnp.float32)
    for i, d in enumerate(DILATIONS):
        conv = cconv(cur, params["w_dil0"][i], params["w_dil1"][i], d)
        gated = jnp.tanh(conv) * jax.nn.sigmoid(conv)
        nl = conv.shape[1]
        residual = params["w_res"][i] * gated + params["b_res"][i] + cur[:, cur.shape[1] - nl:]
        skip = params["w_skip"][i] * gated + params["b_skip"][i]
        skip_sum = skip_sum + skip[:, nl - T:]
        cur = residual
    y = jnp.maximum(skip_sum, 0.0)
    y = params["w_dense"][0] * y
    y = jnp.maximum(y, 0.0)
    y = params["w_dense"][1] * y
    y = jnp.exp(y - y)                      # softmax over the singleton channel dim
    out = y @ params["w_lin"].T + params["b_lin"]
    return out.reshape(B, 1, -1)


if __name__ == "__main__":
    SEQ_LEN = 128         # > 45 receptive field; multiple of 128 keeps lanes native
    OUTPUT_SIZE = 8
    BATCH = 2

    key = jax.random.PRNGKey(0)
    kx, kp = jax.random.split(key)
    x = jax.random.normal(kx, (BATCH, 1, SEQ_LEN), jnp.float32)
    params = init_params(kp, SEQ_LEN, OUTPUT_SIZE)

    out = wavenet_classifier_forward(x, params)
    out = jax.block_until_ready(out)
    assert out.shape == (BATCH, 1, OUTPUT_SIZE)

    ref = reference_forward(x, params)
    np.testing.assert_allclose(np.asarray(out), np.asarray(ref), rtol=1e-3, atol=1e-3)

    print("KERNEL_OK")
</pallas_src>

<mosaic_0001>
module attributes {stable_mosaic.version = 11 : i64} {
  func.func @wavenet_classifier_kernel(%arg0: i32, %arg1: memref<8x128xf32, #tpu.memory_space<vmem>>, %arg2: memref<2xf32, #tpu.memory_space<smem>>, %arg3: memref<12xf32, #tpu.memory_space<smem>>, %arg4: memref<12xf32, #tpu.memory_space<smem>>, %arg5: memref<12xf32, #tpu.memory_space<smem>>, %arg6: memref<12xf32, #tpu.memory_space<smem>>, %arg7: memref<12xf32, #tpu.memory_space<smem>>, %arg8: memref<12xf32, #tpu.memory_space<smem>>, %arg9: memref<2xf32, #tpu.memory_space<smem>>, %arg10: memref<128x128xf32, #tpu.memory_space<vmem>>, %arg11: memref<1x128xf32, #tpu.memory_space<vmem>>, %arg12: memref<8x128xf32, #tpu.memory_space<vmem>>) attributes {dimension_semantics = [#tpu.dimension_semantics<parallel>], iteration_bounds = array<i64: 1>, scalar_prefetch = 0 : i64, scratch_operands = 0 : i64, tpu.core_type = #tpu.core_type<tc>, window_params = [{transform_indices = @transform_0, window_bounds = array<i64: 8, 128>}, {transform_indices = @transform_1, window_bounds = array<i64: 2>}, {transform_indices = @transform_2, window_bounds = array<i64: 12>}, {transform_indices = @transform_3, window_bounds = array<i64: 12>}, {transform_indices = @transform_4, window_bounds = array<i64: 12>}, {transform_indices = @transform_5, window_bounds = array<i64: 12>}, {transform_indices = @transform_6, window_bounds = array<i64: 12>}, {transform_indices = @transform_7, window_bounds = array<i64: 12>}, {transform_indices = @transform_8, window_bounds = array<i64: 2>}, {pipeline_mode = #tpu.pipeline_mode<synchronous>, transform_indices = @transform_9, window_bounds = array<i64: 128, 128>}, {pipeline_mode = #tpu.pipeline_mode<synchronous>, transform_indices = @transform_10, window_bounds = array<i64: 1, 128>}, {transform_indices = @transform_11, window_bounds = array<i64: 8, 128>}]} {
    %0 = tpu.iota {dimensions = array<i32: 1>} : vector<8x128xi32>
    %c0 = arith.constant 0 : index
    %c0_0 = arith.constant 0 : index
    %1 = vector.load %arg1[%c0, %c0_0] : memref<8x128xf32, #tpu.memory_space<vmem>>, vector<8x128xf32>
    %c0_1 = arith.constant 0 : index
    %2 = memref.load %arg2[%c0_1] : memref<2xf32, #tpu.memory_space<smem>>
    %c1_i32 = arith.constant 1 : i32
    %3 = vector.broadcast %c1_i32 : i32 to vector<8x128xi32>
    %4 = arith.cmpi sge, %0, %3 : vector<8x128xi32>
    %c1_i32_2 = arith.constant 1 : i32
    %5 = tpu.dynamic_rotate %1 by %c1_i32_2 dim 1 : vector<8x128xf32>, i32 -> vector<8x128xf32>
    %cst = arith.constant 0.000000e+00 : f32
    %6 = vector.broadcast %cst : f32 to vector<8x128xf32>
    %7 = arith.select %4, %5, %6 : vector<8x128xi1>, vector<8x128xf32>
    %8 = vector.broadcast %2 : f32 to vector<8x128xf32>
    %9 = arith.mulf %8, %7 : vector<8x128xf32>
    %c1 = arith.constant 1 : index
    %10 = memref.load %arg2[%c1] : memref<2xf32, #tpu.memory_space<smem>>
    %11 = vector.broadcast %10 : f32 to vector<8x128xf32>
    %12 = arith.mulf %11, %1 : vector<8x128xf32>
    %13 = arith.addf %9, %12 : vector<8x128xf32>
    %cst_3 = arith.constant 0.000000e+00 : f32
    %14 = vector.broadcast %cst_3 : f32 to vector<8x128xf32>
    %c0_4 = arith.constant 0 : index
    %15 = memref.load %arg3[%c0_4] : memref<12xf32, #tpu.memory_space<smem>>
    %c1_i32_5 = arith.constant 1 : i32
    %16 = vector.broadcast %c1_i32_5 : i32 to vector<8x128xi32>
    %17 = arith.cmpi sge, %0, %16 : vector<8x128xi32>
    %c1_i32_6 = arith.constant 1 : i32
    %18 = tpu.dynamic_rotate %13 by %c1_i32_6 dim 1 : vector<8x128xf32>, i32 -> vector<8x128xf32>
    %cst_7 = arith.constant 0.000000e+00 : f32
    %19 = vector.broadcast %cst_7 : f32 to vector<8x128xf32>
    %20 = arith.select %17, %18, %19 : vector<8x128xi1>, vector<8x128xf32>
    %21 = vector.broadcast %15 : f32 to vector<8x128xf32>
    %22 = arith.mulf %21, %20 : vector<8x128xf32>
    %c0_8 = arith.constant 0 : index
    %23 = memref.load %arg4[%c0_8] : memref<12xf32, #tpu.memory_space<smem>>
    %24 = vector.broadcast %23 : f32 to vector<8x128xf32>
    %25 = arith.mulf %24, %13 : vector<8x128xf32>
    %26 = arith.addf %22, %25 : vector<8x128xf32>
    %27 = math.absf %26 : vector<8x128xf32>
    %cst_9 = arith.constant 0.000000e+00 : f32
    %28 = vector.broadcast %cst_9 : f32 to vector<8x128xf32>
    %29 = arith.subf %28, %27 : vector<8x128xf32>
    %30 = math.exp %29 : vector<8x128xf32>
    %31 = arith.mulf %30, %30 : vector<8x128xf32>
    %cst_10 = arith.constant 1.000000e+00 : f32
    %32 = vector.broadcast %cst_10 : f32 to vector<8x128xf32>
    %33 = arith.addf %32, %31 : vector<8x128xf32>
    %34 = tpu.reciprocal %33 {approx = true} : vector<8x128xf32> -> vector<8x128xf32>
    %35 = arith.mulf %33, %34 : vector<8x128xf32>
    %cst_11 = arith.constant 2.000000e+00 : f32
    %36 = vector.broadcast %cst_11 : f32 to vector<8x128xf32>
    %37 = arith.subf %36, %35 : vector<8x128xf32>
    %38 = arith.mulf %34, %37 : vector<8x128xf32>
    %cst_12 = arith.constant 1.000000e+00 : f32
    %39 = vector.broadcast %cst_12 : f32 to vector<8x128xf32>
    %40 = arith.subf %39, %30 : vector<8x128xf32>
    %cst_13 = arith.constant 0.000000e+00 : f32
    %41 = vector.broadcast %cst_13 : f32 to vector<8x128xf32>
    %42 = arith.cmpf oge, %26, %41 : vector<8x128xf32>
    %cst_14 = arith.constant 0.000000e+00 : f32
    %43 = vector.broadcast %cst_14 : f32 to vector<8x128xf32>
    %44 = arith.subf %43, %30 : vector<8x128xf32>
    %cst_15 = arith.constant 1.000000e+00 : f32
    %45 = vector.broadcast %cst_15 : f32 to vector<8x128xf32>
    %46 = arith.select %42, %45, %44 : vector<8x128xi1>, vector<8x128xf32>
    %47 = arith.mulf %40, %46 : vector<8x128xf32>
    %48 = arith.mulf %47, %38 : vector<8x128xf32>
    %c0_16 = arith.constant 0 : index
    %49 = memref.load %arg7[%c0_16] : memref<12xf32, #tpu.memory_space<smem>>
    %50 = vector.broadcast %49 : f32 to vector<8x128xf32>
    %51 = arith.mulf %50, %48 : vector<8x128xf32>
    %c0_17 = arith.constant 0 : index
    %52 = memref.load %arg8[%c0_17] : memref<12xf32, #tpu.memory_space<smem>>
    %53 = vector.broadcast %52 : f32 to vector<8x128xf32>
    %54 = arith.addf %51, %53 : vector<8x128xf32>
    %55 = arith.addf %14, %54 : vector<8x128xf32>
    %c0_18 = arith.constant 0 : index
    %56 = memref.load %arg5[%c0_18] : memref<12xf32, #tpu.memory_space<smem>>
    %57 = vector.broadcast %56 : f32 to vector<8x128xf32>
    %58 = arith.mulf %57, %48 : vector<8x128xf32>
    %c0_19 = arith.constant 0 : index
    %59 = memref.load %arg6[%c0_19] : memref<12xf32, #tpu.memory_space<smem>>
    %60 = vector.broadcast %59 : f32 to vector<8x128xf32>
    %61 = arith.addf %58, %60 : vector<8x128xf32>
    %62 = arith.addf %61, %13 : vector<8x128xf32>
    %c1_20 = arith.constant 1 : index
    %63 = memref.load %arg3[%c1_20] : memref<12xf32, #tpu.memory_space<smem>>
    %c2_i32 = arith.constant 2 : i32
    %64 = vector.broadcast %c2_i32 : i32 to vector<8x128xi32>
    %65 = arith.cmpi sge, %0, %64 : vector<8x128xi32>
    %c2_i32_21 = arith.constant 2 : i32
    %66 = tpu.dynamic_rotate %62 by %c2_i32_21 dim 1 : vector<8x128xf32>, i32 -> vector<8x128xf32>
    %cst_22 = arith.constant 0.000000e+00 : f32
    %67 = vector.broadcast %cst_22 : f32 to vector<8x128xf32>
    %68 = arith.select %65, %66, %67 : vector<8x128xi1>, vector<8x128xf32>
    %69 = vector.broadcast %63 : f32 to vector<8x128xf32>
    %70 = arith.mulf %69, %68 : vector<8x128xf32>
    %c1_23 = arith.constant 1 : index
    %71 = memref.load %arg4[%c1_23] : memref<12xf32, #tpu.memory_space<smem>>
    %72 = vector.broadcast %71 : f32 to vector<8x128xf32>
    %73 = arith.mulf %72, %62 : vector<8x128xf32>
    %74 = arith.addf %70, %73 : vector<8x128xf32>
    %75 = math.absf %74 : vector<8x128xf32>
    %cst_24 = arith.constant 0.000000e+00 : f32
    %76 = vector.broadcast %cst_24 : f32 to vector<8x128xf32>
    %77 = arith.subf %76, %75 : vector<8x128xf32>
    %78 = math.exp %77 : vector<8x128xf32>
    %79 = arith.mulf %78, %78 : vector<8x128xf32>
    %cst_25 = arith.constant 1.000000e+00 : f32
    %80 = vector.broadcast %cst_25 : f32 to vector<8x128xf32>
    %81 = arith.addf %80, %79 : vector<8x128xf32>
    %82 = tpu.reciprocal %81 {approx = true} : vector<8x128xf32> -> vector<8x128xf32>
    %83 = arith.mulf %81, %82 : vector<8x128xf32>
    %cst_26 = arith.constant 2.000000e+00 : f32
    %84 = vector.broadcast %cst_26 : f32 to vector<8x128xf32>
    %85 = arith.subf %84, %83 : vector<8x128xf32>
    %86 = arith.mulf %82, %85 : vector<8x128xf32>
    %cst_27 = arith.constant 1.000000e+00 : f32
    %87 = vector.broadcast %cst_27 : f32 to vector<8x128xf32>
    %88 = arith.subf %87, %78 : vector<8x128xf32>
    %cst_28 = arith.constant 0.000000e+00 : f32
    %89 = vector.broadcast %cst_28 : f32 to vector<8x128xf32>
    %90 = arith.cmpf oge, %74, %89 : vector<8x128xf32>
    %cst_29 = arith.constant 0.000000e+00 : f32
    %91 = vector.broadcast %cst_29 : f32 to vector<8x128xf32>
    %92 = arith.subf %91, %78 : vector<8x128xf32>
    %cst_30 = arith.constant 1.000000e+00 : f32
    %93 = vector.broadcast %cst_30 : f32 to vector<8x128xf32>
    %94 = arith.select %90, %93, %92 : vector<8x128xi1>, vector<8x128xf32>
    %95 = arith.mulf %88, %94 : vector<8x128xf32>
    %96 = arith.mulf %95, %86 : vector<8x128xf32>
    %c1_31 = arith.constant 1 : index
    %97 = memref.load %arg7[%c1_31] : memref<12xf32, #tpu.memory_space<smem>>
    %98 = vector.broadcast %97 : f32 to vector<8x128xf32>
    %99 = arith.mulf %98, %96 : vector<8x128xf32>
    %c1_32 = arith.constant 1 : index
    %100 = memref.load %arg8[%c1_32] : memref<12xf32, #tpu.memory_space<smem>>
    %101 = vector.broadcast %100 : f32 to vector<8x128xf32>
    %102 = arith.addf %99, %101 : vector<8x128xf32>
    %103 = arith.addf %55, %102 : vector<8x128xf32>
    %c1_33 = arith.constant 1 : index
    %104 = memref.load %arg5[%c1_33] : memref<12xf32, #tpu.memory_space<smem>>
    %105 = vector.broadcast %104 : f32 to vector<8x128xf32>
    %106 = arith.mulf %105, %96 : vector<8x128xf32>
    %c1_34 = arith.constant 1 : index
    %107 = memref.load %arg6[%c1_34] : memref<12xf32, #tpu.memory_space<smem>>
    %108 = vector.broadcast %107 : f32 to vector<8x128xf32>
    %109 = arith.addf %106, %108 : vector<8x128xf32>
    %110 = arith.addf %109, %62 : vector<8x128xf32>
    %c1_i32_35 = arith.constant 1 : i32
    %111 = vector.broadcast %c1_i32_35 : i32 to vector<8x128xi32>
    %112 = arith.cmpi sge, %0, %111 : vector<8x128xi32>
    %cst_36 = arith.constant 0.000000e+00 : f32
    %113 = vector.broadcast %cst_36 : f32 to vector<8x128xf32>
    %114 = arith.select %112, %110, %113 : vector<8x128xi1>, vector<8x128xf32>
    %c2 = arith.constant 2 : index
    %115 = memref.load %arg3[%c2] : memref<12xf32, #tpu.memory_space<smem>>
    %c4_i32 = arith.constant 4 : i32
    %116 = vector.broadcast %c4_i32 : i32 to vector<8x128xi32>
    %117 = arith.cmpi sge, %0, %116 : vector<8x128xi32>
    %c4_i32_37 = arith.constant 4 : i32
    %118 = tpu.dynamic_rotate %114 by %c4_i32_37 dim 1 : vector<8x128xf32>, i32 -> vector<8x128xf32>
    %cst_38 = arith.constant 0.000000e+00 : f32
    %119 = vector.broadcast %cst_38 : f32 to vector<8x128xf32>
    %120 = arith.select %117, %118, %119 : vector<8x128xi1>, vector<8x128xf32>
    %121 = vector.broadcast %115 : f32 to vector<8x128xf32>
    %122 = arith.mulf %121, %120 : vector<8x128xf32>
    %c2_39 = arith.constant 2 : index
    %123 = memref.load %arg4[%c2_39] : memref<12xf32, #tpu.memory_space<smem>>
    %124 = vector.broadcast %123 : f32 to vector<8x128xf32>
    %125 = arith.mulf %124, %114 : vector<8x128xf32>
    %126 = arith.addf %122, %125 : vector<8x128xf32>
    %127 = math.absf %126 : vector<8x128xf32>
    %cst_40 = arith.constant 0.000000e+00 : f32
    %128 = vector.broadcast %cst_40 : f32 to vector<8x128xf32>
    %129 = arith.subf %128, %127 : vector<8x128xf32>
    %130 = math.exp %129 : vector<8x128xf32>
    %131 = arith.mulf %130, %130 : vector<8x128xf32>
    %cst_41 = arith.constant 1.000000e+00 : f32
    %132 = vector.broadcast %cst_41 : f32 to vector<8x128xf32>
    %133 = arith.addf %132, %131 : vector<8x128xf32>
    %134 = tpu.reciprocal %133 {approx = true} : vector<8x128xf32> -> vector<8x128xf32>
    %135 = arith.mulf %133, %134 : vector<8x128xf32>
    %cst_42 = arith.constant 2.000000e+00 : f32
    %136 = vector.broadcast %cst_42 : f32 to vector<8x128xf32>
    %137 = arith.subf %136, %135 : vector<8x128xf32>
    %138 = arith.mulf %134, %137 : vector<8x128xf32>
    %cst_43 = arith.constant 1.000000e+00 : f32
    %139 = vector.broadcast %cst_43 : f32 to vector<8x128xf32>
    %140 = arith.subf %139, %130 : vector<8x128xf32>
    %cst_44 = arith.constant 0.000000e+00 : f32
    %141 = vector.broadcast %cst_44 : f32 to vector<8x128xf32>
    %142 = arith.cmpf oge, %126, %141 : vector<8x128xf32>
    %cst_45 = arith.constant 0.000000e+00 : f32
    %143 = vector.broadcast %cst_45 : f32 to vector<8x128xf32>
    %144 = arith.subf %143, %130 : vector<8x128xf32>
    %cst_46 = arith.constant 1.000000e+00 : f32
    %145 = vector.broadcast %cst_46 : f32 to vector<8x128xf32>
    %146 = arith.select %142, %145, %144 : vector<8x128xi1>, vector<8x128xf32>
    %147 = arith.mulf %140, %146 : vector<8x128xf32>
    %148 = arith.mulf %147, %138 : vector<8x128xf32>
    %c2_47 = arith.constant 2 : index
    %149 = memref.load %arg7[%c2_47] : memref<12xf32, #tpu.memory_space<smem>>
    %150 = vector.broadcast %149 : f32 to vector<8x128xf32>
    %151 = arith.mulf %150, %148 : vector<8x128xf32>
    %c2_48 = arith.constant 2 : index
    %152 = memref.load %arg8[%c2_48] : memref<12xf32, #tpu.memory_space<smem>>
    %153 = vector.broadcast %152 : f32 to vector<8x128xf32>
    %154 = arith.addf %151, %153 : vector<8x128xf32>
    %155 = arith.addf %103, %154 : vector<8x128xf32>
    %c2_49 = arith.constant 2 : index
    %156 = memref.load %arg5[%c2_49] : memref<12xf32, #tpu.memory_space<smem>>
    %157 = vector.broadcast %156 : f32 to vector<8x128xf32>
    %158 = arith.mulf %157, %148 : vector<8x128xf32>
    %c2_50 = arith.constant 2 : index
    %159 = memref.load %arg6[%c2_50] : memref<12xf32, #tpu.memory_space<smem>>
    %160 = vector.broadcast %159 : f32 to vector<8x128xf32>
    %161 = arith.addf %158, %160 : vector<8x128xf32>
    %162 = arith.addf %161, %114 : vector<8x128xf32>
    %c4_i32_51 = arith.constant 4 : i32
    %163 = vector.broadcast %c4_i32_51 : i32 to vector<8x128xi32>
    %164 = arith.cmpi sge, %0, %163 : vector<8x128xi32>
    %cst_52 = arith.constant 0.000000e+00 : f32
    %165 = vector.broadcast %cst_52 : f32 to vector<8x128xf32>
    %166 = arith.select %164, %162, %165 : vector<8x128xi1>, vector<8x128xf32>
    %c3 = arith.constant 3 : index
    %167 = memref.load %arg3[%c3] : memref<12xf32, #tpu.memory_space<smem>>
    %c8_i32 = arith.constant 8 : i32
    %168 = vector.broadcast %c8_i32 : i32 to vector<8x128xi32>
    %169 = arith.cmpi sge, %0, %168 : vector<8x128xi32>
    %c8_i32_53 = arith.constant 8 : i32
    %170 = tpu.dynamic_rotate %166 by %c8_i32_53 dim 1 : vector<8x128xf32>, i32 -> vector<8x128xf32>
    %cst_54 = arith.constant 0.000000e+00 : f32
    %171 = vector.broadcast %cst_54 : f32 to vector<8x128xf32>
    %172 = arith.select %169, %170, %171 : vector<8x128xi1>, vector<8x128xf32>
    %173 = vector.broadcast %167 : f32 to vector<8x128xf32>
    %174 = arith.mulf %173, %172 : vector<8x128xf32>
    %c3_55 = arith.constant 3 : index
    %175 = memref.load %arg4[%c3_55] : memref<12xf32, #tpu.memory_space<smem>>
    %176 = vector.broadcast %175 : f32 to vector<8x128xf32>
    %177 = arith.mulf %176, %166 : vector<8x128xf32>
    %178 = arith.addf %174, %177 : vector<8x128xf32>
    %179 = math.absf %178 : vector<8x128xf32>
    %cst_56 = arith.constant 0.000000e+00 : f32
    %180 = vector.broadcast %cst_56 : f32 to vector<8x128xf32>
    %181 = arith.subf %180, %179 : vector<8x128xf32>
    %182 = math.exp %181 : vector<8x128xf32>
    %183 = arith.mulf %182, %182 : vector<8x128xf32>
    %cst_57 = arith.constant 1.000000e+00 : f32
    %184 = vector.broadcast %cst_57 : f32 to vector<8x128xf32>
    %185 = arith.addf %184, %183 : vector<8x128xf32>
    %186 = tpu.reciprocal %185 {approx = true} : vector<8x128xf32> -> vector<8x128xf32>
    %187 = arith.mulf %185, %186 : vector<8x128xf32>
    %cst_58 = arith.constant 2.000000e+00 : f32
    %188 = vector.broadcast %cst_58 : f32 to vector<8x128xf32>
    %189 = arith.subf %188, %187 : vector<8x128xf32>
    %190 = arith.mulf %186, %189 : vector<8x128xf32>
    %cst_59 = arith.constant 1.000000e+00 : f32
    %191 = vector.broadcast %cst_59 : f32 to vector<8x128xf32>
    %192 = arith.subf %191, %182 : vector<8x128xf32>
    %cst_60 = arith.constant 0.000000e+00 : f32
    %193 = vector.broadcast %cst_60 : f32 to vector<8x128xf32>
    %194 = arith.cmpf oge, %178, %193 : vector<8x128xf32>
    %cst_61 = arith.constant 0.000000e+00 : f32
    %195 = vector.broadcast %cst_61 : f32 to vector<8x128xf32>
    %196 = arith.subf %195, %182 : vector<8x128xf32>
    %cst_62 = arith.constant 1.000000e+00 : f32
    %197 = vector.broadcast %cst_62 : f32 to vector<8x128xf32>
    %198 = arith.select %194, %197, %196 : vector<8x128xi1>, vector<8x128xf32>
    %199 = arith.mulf %192, %198 : vector<8x128xf32>
    %200 = arith.mulf %199, %190 : vector<8x128xf32>
    %c3_63 = arith.constant 3 : index
    %201 = memref.load %arg7[%c3_63] : memref<12xf32, #tpu.memory_space<smem>>
    %202 = vector.broadcast %201 : f32 to vector<8x128xf32>
    %203 = arith.mulf %202, %200 : vector<8x128xf32>
    %c3_64 = arith.constant 3 : index
    %204 = memref.load %arg8[%c3_64] : memref<12xf32, #tpu.memory_space<smem>>
    %205 = vector.broadcast %204 : f32 to vector<8x128xf32>
    %206 = arith.addf %203, %205 : vector<8x128xf32>
    %207 = arith.addf %155, %206 : vector<8x128xf32>
    %c3_65 = arith.constant 3 : index
    %208 = memref.load %arg5[%c3_65] : memref<12xf32, #tpu.memory_space<smem>>
    %209 = vector.broadcast %208 : f32 to vector<8x128xf32>
    %210 = arith.mulf %209, %200 : vector<8x128xf32>
    %c3_66 = arith.constant 3 : index
    %211 = memref.load %arg6[%c3_66] : memref<12xf32, #tpu.memory_space<smem>>
    %212 = vector.broadcast %211 : f32 to vector<8x128xf32>
    %213 = arith.addf %210, %212 : vector<8x128xf32>
    %214 = arith.addf %213, %166 : vector<8x128xf32>
    %c11_i32 = arith.constant 11 : i32
    %215 = vector.broadcast %c11_i32 : i32 to vector<8x128xi32>
    %216 = arith.cmpi sge, %0, %215 : vector<8x128xi32>
    %cst_67 = arith.constant 0.000000e+00 : f32
    %217 = vector.broadcast %cst_67 : f32 to vector<8x128xf32>
    %218 = arith.select %216, %214, %217 : vector<8x128xi1>, vector<8x128xf32>
    %c4 = arith.constant 4 : index
    %219 = memref.load %arg3[%c4] : memref<12xf32, #tpu.memory_space<smem>>
    %c1_i32_68 = arith.constant 1 : i32
    %220 = vector.broadcast %c1_i32_68 : i32 to vector<8x128xi32>
    %221 = arith.cmpi sge, %0, %220 : vector<8x128xi32>
    %c1_i32_69 = arith.constant 1 : i32
    %222 = tpu.dynamic_rotate %218 by %c1_i32_69 dim 1 : vector<8x128xf32>, i32 -> vector<8x128xf32>
    %cst_70 = arith.constant 0.000000e+00 : f32
    %223 = vector.broadcast %cst_70 : f32 to vector<8x128xf32>
    %224 = arith.select %221, %222, %223 : vector<8x128xi1>, vector<8x128xf32>
    %225 = vector.broadcast %219 : f32 to vector<8x128xf32>
    %226 = arith.mulf %225, %224 : vector<8x128xf32>
    %c4_71 = arith.constant 4 : index
    %227 = memref.load %arg4[%c4_71] : memref<12xf32, #tpu.memory_space<smem>>
    %228 = vector.broadcast %227 : f32 to vector<8x128xf32>
    %229 = arith.mulf %228, %218 : vector<8x128xf32>
    %230 = arith.addf %226, %229 : vector<8x128xf32>
    %231 = math.absf %230 : vector<8x128xf32>
    %cst_72 = arith.constant 0.000000e+00 : f32
    %232 = vector.broadcast %cst_72 : f32 to vector<8x128xf32>
    %233 = arith.subf %232, %231 : vector<8x128xf32>
    %234 = math.exp %233 : vector<8x128xf32>
    %235 = arith.mulf %234, %234 : vector<8x128xf32>
    %cst_73 = arith.constant 1.000000e+00 : f32
    %236 = vector.broadcast %cst_73 : f32 to vector<8x128xf32>
    %237 = arith.addf %236, %235 : vector<8x128xf32>
    %238 = tpu.reciprocal %237 {approx = true} : vector<8x128xf32> -> vector<8x128xf32>
    %239 = arith.mulf %237, %238 : vector<8x128xf32>
    %cst_74 = arith.constant 2.000000e+00 : f32
    %240 = vector.broadcast %cst_74 : f32 to vector<8x128xf32>
    %241 = arith.subf %240, %239 : vector<8x128xf32>
    %242 = arith.mulf %238, %241 : vector<8x128xf32>
    %cst_75 = arith.constant 1.000000e+00 : f32
    %243 = vector.broadcast %cst_75 : f32 to vector<8x128xf32>
    %244 = arith.subf %243, %234 : vector<8x128xf32>
    %cst_76 = arith.constant 0.000000e+00 : f32
    %245 = vector.broadcast %cst_76 : f32 to vector<8x128xf32>
    %246 = arith.cmpf oge, %230, %245 : vector<8x128xf32>
    %cst_77 = arith.constant 0.000000e+00 : f32
    %247 = vector.broadcast %cst_77 : f32 to vector<8x128xf32>
    %248 = arith.subf %247, %234 : vector<8x128xf32>
    %cst_78 = arith.constant 1.000000e+00 : f32
    %249 = vector.broadcast %cst_78 : f32 to vector<8x128xf32>
    %250 = arith.select %246, %249, %248 : vector<8x128xi1>, vector<8x128xf32>
    %251 = arith.mulf %244, %250 : vector<8x128xf32>
    %252 = arith.mulf %251, %242 : vector<8x128xf32>
    %c4_79 = arith.constant 4 : index
    %253 = memref.load %arg7[%c4_79] : memref<12xf32, #tpu.memory_space<smem>>
    %254 = vector.broadcast %253 : f32 to vector<8x128xf32>
    %255 = arith.mulf %254, %252 : vector<8x128xf32>
    %c4_80 = arith.constant 4 : index
    %256 = memref.load %arg8[%c4_80] : memref<12xf32, #tpu.memory_space<smem>>
    %257 = vector.broadcast %256 : f32 to vector<8x128xf32>
    %258 = arith.addf %255, %257 : vector<8x128xf32>
    %259 = arith.addf %207, %258 : vector<8x128xf32>
    %c4_81 = arith.constant 4 : index
    %260 = memref.load %arg5[%c4_81] : memref<12xf32, #tpu.memory_space<smem>>
    %261 = vector.broadcast %260 : f32 to vector<8x128xf32>
    %262 = arith.mulf %261, %252 : vector<8x128xf32>
    %c4_82 = arith.constant 4 : index
    %263 = memref.load %arg6[%c4_82] : memref<12xf32, #tpu.memory_space<smem>>
    %264 = vector.broadcast %263 : f32 to vector<8x128xf32>
    %265 = arith.addf %262, %264 : vector<8x128xf32>
    %266 = arith.addf %265, %218 : vector<8x128xf32>
    %c11_i32_83 = arith.constant 11 : i32
    %267 = vector.broadcast %c11_i32_83 : i32 to vector<8x128xi32>
    %268 = arith.cmpi sge, %0, %267 : vector<8x128xi32>
    %cst_84 = arith.constant 0.000000e+00 : f32
    %269 = vector.broadcast %cst_84 : f32 to vector<8x128xf32>
    %270 = arith.select %268, %266, %269 : vector<8x128xi1>, vector<8x128xf32>
    %c5 = arith.constant 5 : index
    %271 = memref.load %arg3[%c5] : memref<12xf32, #tpu.memory_space<smem>>
    %c2_i32_85 = arith.constant 2 : i32
    %272 = vector.broadcast %c2_i32_85 : i32 to vector<8x128xi32>
    %273 = arith.cmpi sge, %0, %272 : vector<8x128xi32>
    %c2_i32_86 = arith.constant 2 : i32
    %274 = tpu.dynamic_rotate %270 by %c2_i32_86 dim 1 : vector<8x128xf32>, i32 -> vector<8x128xf32>
    %cst_87 = arith.constant 0.000000e+00 : f32
    %275 = vector.broadcast %cst_87 : f32 to vector<8x128xf32>
    %276 = arith.select %273, %274, %275 : vector<8x128xi1>, vector<8x128xf32>
    %277 = vector.broadcast %271 : f32 to vector<8x128xf32>
    %278 = arith.mulf %277, %276 : vector<8x128xf32>
    %c5_88 = arith.constant 5 : index
    %279 = memref.load %arg4[%c5_88] : memref<12xf32, #tpu.memory_space<smem>>
    %280 = vector.broadcast %279 : f32 to vector<8x128xf32>
    %281 = arith.mulf %280, %270 : vector<8x128xf32>
    %282 = arith.addf %278, %281 : vector<8x128xf32>
    %283 = math.absf %282 : vector<8x128xf32>
    %cst_89 = arith.constant 0.000000e+00 : f32
    %284 = vector.broadcast %cst_89 : f32 to vector<8x128xf32>
    %285 = arith.subf %284, %283 : vector<8x128xf32>
    %286 = math.exp %285 : vector<8x128xf32>
    %287 = arith.mulf %286, %286 : vector<8x128xf32>
    %cst_90 = arith.constant 1.000000e+00 : f32
    %288 = vector.broadcast %cst_90 : f32 to vector<8x128xf32>
    %289 = arith.addf %288, %287 : vector<8x128xf32>
    %290 = tpu.reciprocal %289 {approx = true} : vector<8x128xf32> -> vector<8x128xf32>
    %291 = arith.mulf %289, %290 : vector<8x128xf32>
    %cst_91 = arith.constant 2.000000e+00 : f32
    %292 = vector.broadcast %cst_91 : f32 to vector<8x128xf32>
    %293 = arith.subf %292, %291 : vector<8x128xf32>
    %294 = arith.mulf %290, %293 : vector<8x128xf32>
    %cst_92 = arith.constant 1.000000e+00 : f32
    %295 = vector.broadcast %cst_92 : f32 to vector<8x128xf32>
    %296 = arith.subf %295, %286 : vector<8x128xf32>
    %cst_93 = arith.constant 0.000000e+00 : f32
    %297 = vector.broadcast %cst_93 : f32 to vector<8x128xf32>
    %298 = arith.cmpf oge, %282, %297 : vector<8x128xf32>
    %cst_94 = arith.constant 0.000000e+00 : f32
    %299 = vector.broadcast %cst_94 : f32 to vector<8x128xf32>
    %300 = arith.subf %299, %286 : vector<8x128xf32>
    %cst_95 = arith.constant 1.000000e+00 : f32
    %301 = vector.broadcast %cst_95 : f32 to vector<8x128xf32>
    %302 = arith.select %298, %301, %300 : vector<8x128xi1>, vector<8x128xf32>
    %303 = arith.mulf %296, %302 : vector<8x128xf32>
    %304 = arith.mulf %303, %294 : vector<8x128xf32>
    %c5_96 = arith.constant 5 : index
    %305 = memref.load %arg7[%c5_96] : memref<12xf32, #tpu.memory_space<smem>>
    %306 = vector.broadcast %305 : f32 to vector<8x128xf32>
    %307 = arith.mulf %306, %304 : vector<8x128xf32>
    %c5_97 = arith.constant 5 : index
    %308 = memref.load %arg8[%c5_97] : memref<12xf32, #tpu.memory_space<smem>>
    %309 = vector.broadcast %308 : f32 to vector<8x128xf32>
    %310 = arith.addf %307, %309 : vector<8x128xf32>
    %311 = arith.addf %259, %310 : vector<8x128xf32>
    %c5_98 = arith.constant 5 : index
    %312 = memref.load %arg5[%c5_98] : memref<12xf32, #tpu.memory_space<smem>>
    %313 = vector.broadcast %312 : f32 to vector<8x128xf32>
    %314 = arith.mulf %313, %304 : vector<8x128xf32>
    %c5_99 = arith.constant 5 : index
    %315 = memref.load %arg6[%c5_99] : memref<12xf32, #tpu.memory_space<smem>>
    %316 = vector.broadcast %315 : f32 to vector<8x128xf32>
    %317 = arith.addf %314, %316 : vector<8x128xf32>
    %318 = arith.addf %317, %270 : vector<8x128xf32>
    %c12_i32 = arith.constant 12 : i32
    %319 = vector.broadcast %c12_i32 : i32 to vector<8x128xi32>
    %320 = arith.cmpi sge, %0, %319 : vector<8x128xi32>
    %cst_100 = arith.constant 0.000000e+00 : f32
    %321 = vector.broadcast %cst_100 : f32 to vector<8x128xf32>
    %322 = arith.select %320, %318, %321 : vector<8x128xi1>, vector<8x128xf32>
    %c6 = arith.constant 6 : index
    %323 = memref.load %arg3[%c6] : memref<12xf32, #tpu.memory_space<smem>>
    %c4_i32_101 = arith.constant 4 : i32
    %324 = vector.broadcast %c4_i32_101 : i32 to vector<8x128xi32>
    %325 = arith.cmpi sge, %0, %324 : vector<8x128xi32>
    %c4_i32_102 = arith.constant 4 : i32
    %326 = tpu.dynamic_rotate %322 by %c4_i32_102 dim 1 : vector<8x128xf32>, i32 -> vector<8x128xf32>
    %cst_103 = arith.constant 0.000000e+00 : f32
    %327 = vector.broadcast %cst_103 : f32 to vector<8x128xf32>
    %328 = arith.select %325, %326, %327 : vector<8x128xi1>, vector<8x128xf32>
    %329 = vector.broadcast %323 : f32 to vector<8x128xf32>
    %330 = arith.mulf %329, %328 : vector<8x128xf32>
    %c6_104 = arith.constant 6 : index
    %331 = memref.load %arg4[%c6_104] : memref<12xf32, #tpu.memory_space<smem>>
    %332 = vector.broadcast %331 : f32 to vector<8x128xf32>
    %333 = arith.mulf %332, %322 : vector<8x128xf32>
    %334 = arith.addf %330, %333 : vector<8x128xf32>
    %335 = math.absf %334 : vector<8x128xf32>
    %cst_105 = arith.constant 0.000000e+00 : f32
    %336 = vector.broadcast %cst_105 : f32 to vector<8x128xf32>
    %337 = arith.subf %336, %335 : vector<8x128xf32>
    %338 = math.exp %337 : vector<8x128xf32>
    %339 = arith.mulf %338, %338 : vector<8x128xf32>
    %cst_106 = arith.constant 1.000000e+00 : f32
    %340 = vector.broadcast %cst_106 : f32 to vector<8x128xf32>
    %341 = arith.addf %340, %339 : vector<8x128xf32>
    %342 = tpu.reciprocal %341 {approx = true} : vector<8x128xf32> -> vector<8x128xf32>
    %343 = arith.mulf %341, %342 : vector<8x128xf32>
    %cst_107 = arith.constant 2.000000e+00 : f32
    %344 = vector.broadcast %cst_107 : f32 to vector<8x128xf32>
    %345 = arith.subf %344, %343 : vector<8x128xf32>
    %346 = arith.mulf %342, %345 : vector<8x128xf32>
    %cst_108 = arith.constant 1.000000e+00 : f32
    %347 = vector.broadcast %cst_108 : f32 to vector<8x128xf32>
    %348 = arith.subf %347, %338 : vector<8x128xf32>
    %cst_109 = arith.constant 0.000000e+00 : f32
    %349 = vector.broadcast %cst_109 : f32 to vector<8x128xf32>
    %350 = arith.cmpf oge, %334, %349 : vector<8x128xf32>
    %cst_110 = arith.constant 0.000000e+00 : f32
    %351 = vector.broadcast %cst_110 : f32 to vector<8x128xf32>
    %352 = arith.subf %351, %338 : vector<8x128xf32>
    %cst_111 = arith.constant 1.000000e+00 : f32
    %353 = vector.broadcast %cst_111 : f32 to vector<8x128xf32>
    %354 = arith.select %350, %353, %352 : vector<8x128xi1>, vector<8x128xf32>
    %355 = arith.mulf %348, %354 : vector<8x128xf32>
    %356 = arith.mulf %355, %346 : vector<8x128xf32>
    %c6_112 = arith.constant 6 : index
    %357 = memref.load %arg7[%c6_112] : memref<12xf32, #tpu.memory_space<smem>>
    %358 = vector.broadcast %357 : f32 to vector<8x128xf32>
    %359 = arith.mulf %358, %356 : vector<8x128xf32>
    %c6_113 = arith.constant 6 : index
    %360 = memref.load %arg8[%c6_113] : memref<12xf32, #tpu.memory_space<smem>>
    %361 = vector.broadcast %360 : f32 to vector<8x128xf32>
    %362 = arith.addf %359, %361 : vector<8x128xf32>
    %363 = arith.addf %311, %362 : vector<8x128xf32>
    %c6_114 = arith.constant 6 : index
    %364 = memref.load %arg5[%c6_114] : memref<12xf32, #tpu.memory_space<smem>>
    %365 = vector.broadcast %364 : f32 to vector<8x128xf32>
    %366 = arith.mulf %365, %356 : vector<8x128xf32>
    %c6_115 = arith.constant 6 : index
    %367 = memref.load %arg6[%c6_115] : memref<12xf32, #tpu.memory_space<smem>>
    %368 = vector.broadcast %367 : f32 to vector<8x128xf32>
    %369 = arith.addf %366, %368 : vector<8x128xf32>
    %370 = arith.addf %369, %322 : vector<8x128xf32>
    %c15_i32 = arith.constant 15 : i32
    %371 = vector.broadcast %c15_i32 : i32 to vector<8x128xi32>
    %372 = arith.cmpi sge, %0, %371 : vector<8x128xi32>
    %cst_116 = arith.constant 0.000000e+00 : f32
    %373 = vector.broadcast %cst_116 : f32 to vector<8x128xf32>
    %374 = arith.select %372, %370, %373 : vector<8x128xi1>, vector<8x128xf32>
    %c7 = arith.constant 7 : index
    %375 = memref.load %arg3[%c7] : memref<12xf32, #tpu.memory_space<smem>>
    %c8_i32_117 = arith.constant 8 : i32
    %376 = vector.broadcast %c8_i32_117 : i32 to vector<8x128xi32>
    %377 = arith.cmpi sge, %0, %376 : vector<8x128xi32>
    %c8_i32_118 = arith.constant 8 : i32
    %378 = tpu.dynamic_rotate %374 by %c8_i32_118 dim 1 : vector<8x128xf32>, i32 -> vector<8x128xf32>
    %cst_119 = arith.constant 0.000000e+00 : f32
    %379 = vector.broadcast %cst_119 : f32 to vector<8x128xf32>
    %380 = arith.select %377, %378, %379 : vector<8x128xi1>, vector<8x128xf32>
    %381 = vector.broadcast %375 : f32 to vector<8x128xf32>
    %382 = arith.mulf %381, %380 : vector<8x128xf32>
    %c7_120 = arith.constant 7 : index
    %383 = memref.load %arg4[%c7_120] : memref<12xf32, #tpu.memory_space<smem>>
    %384 = vector.broadcast %383 : f32 to vector<8x128xf32>
    %385 = arith.mulf %384, %374 : vector<8x128xf32>
    %386 = arith.addf %382, %385 : vector<8x128xf32>
    %387 = math.absf %386 : vector<8x128xf32>
    %cst_121 = arith.constant 0.000000e+00 : f32
    %388 = vector.broadcast %cst_121 : f32 to vector<8x128xf32>
    %389 = arith.subf %388, %387 : vector<8x128xf32>
    %390 = math.exp %389 : vector<8x128xf32>
    %391 = arith.mulf %390, %390 : vector<8x128xf32>
    %cst_122 = arith.constant 1.000000e+00 : f32
    %392 = vector.broadcast %cst_122 : f32 to vector<8x128xf32>
    %393 = arith.addf %392, %391 : vector<8x128xf32>
    %394 = tpu.reciprocal %393 {approx = true} : vector<8x128xf32> -> vector<8x128xf32>
    %395 = arith.mulf %393, %394 : vector<8x128xf32>
    %cst_123 = arith.constant 2.000000e+00 : f32
    %396 = vector.broadcast %cst_123 : f32 to vector<8x128xf32>
    %397 = arith.subf %396, %395 : vector<8x128xf32>
    %398 = arith.mulf %394, %397 : vector<8x128xf32>
    %cst_124 = arith.constant 1.000000e+00 : f32
    %399 = vector.broadcast %cst_124 : f32 to vector<8x128xf32>
    %400 = arith.subf %399, %390 : vector<8x128xf32>
    %cst_125 = arith.constant 0.000000e+00 : f32
    %401 = vector.broadcast %cst_125 : f32 to vector<8x128xf32>
    %402 = arith.cmpf oge, %386, %401 : vector<8x128xf32>
    %cst_126 = arith.constant 0.000000e+00 : f32
    %403 = vector.broadcast %cst_126 : f32 to vector<8x128xf32>
    %404 = arith.subf %403, %390 : vector<8x128xf32>
    %cst_127 = arith.constant 1.000000e+00 : f32
    %405 = vector.broadcast %cst_127 : f32 to vector<8x128xf32>
    %406 = arith.select %402, %405, %404 : vector<8x128xi1>, vector<8x128xf32>
    %407 = arith.mulf %400, %406 : vector<8x128xf32>
    %408 = arith.mulf %407, %398 : vector<8x128xf32>
    %c7_128 = arith.constant 7 : index
    %409 = memref.load %arg7[%c7_128] : memref<12xf32, #tpu.memory_space<smem>>
    %410 = vector.broadcast %409 : f32 to vector<8x128xf32>
    %411 = arith.mulf %410, %408 : vector<8x128xf32>
    %c7_129 = arith.constant 7 : index
    %412 = memref.load %arg8[%c7_129] : memref<12xf32, #tpu.memory_space<smem>>
    %413 = vector.broadcast %412 : f32 to vector<8x128xf32>
    %414 = arith.addf %411, %413 : vector<8x128xf32>
    %415 = arith.addf %363, %414 : vector<8x128xf32>
    %c7_130 = arith.constant 7 : index
    %416 = memref.load %arg5[%c7_130] : memref<12xf32, #tpu.memory_space<smem>>
    %417 = vector.broadcast %416 : f32 to vector<8x128xf32>
    %418 = arith.mulf %417, %408 : vector<8x128xf32>
    %c7_131 = arith.constant 7 : index
    %419 = memref.load %arg6[%c7_131] : memref<12xf32, #tpu.memory_space<smem>>
    %420 = vector.broadcast %419 : f32 to vector<8x128xf32>
    %421 = arith.addf %418, %420 : vector<8x128xf32>
    %422 = arith.addf %421, %374 : vector<8x128xf32>
    %c22_i32 = arith.constant 22 : i32
    %423 = vector.broadcast %c22_i32 : i32 to vector<8x128xi32>
    %424 = arith.cmpi sge, %0, %423 : vector<8x128xi32>
    %cst_132 = arith.constant 0.000000e+00 : f32
    %425 = vector.broadcast %cst_132 : f32 to vector<8x128xf32>
    %426 = arith.select %424, %422, %425 : vector<8x128xi1>, vector<8x128xf32>
    %c8 = arith.constant 8 : index
    %427 = memref.load %arg3[%c8] : memref<12xf32, #tpu.memory_space<smem>>
    %c1_i32_133 = arith.constant 1 : i32
    %428 = vector.broadcast %c1_i32_133 : i32 to vector<8x128xi32>
    %429 = arith.cmpi sge, %0, %428 : vector<8x128xi32>
    %c1_i32_134 = arith.constant 1 : i32
    %430 = tpu.dynamic_rotate %426 by %c1_i32_134 dim 1 : vector<8x128xf32>, i32 -> vector<8x128xf32>
    %cst_135 = arith.constant 0.000000e+00 : f32
    %431 = vector.broadcast %cst_135 : f32 to vector<8x128xf32>
    %432 = arith.select %429, %430, %431 : vector<8x128xi1>, vector<8x128xf32>
    %433 = vector.broadcast %427 : f32 to vector<8x128xf32>
    %434 = arith.mulf %433, %432 : vector<8x128xf32>
    %c8_136 = arith.constant 8 : index
    %435 = memref.load %arg4[%c8_136] : memref<12xf32, #tpu.memory_space<smem>>
    %436 = vector.broadcast %435 : f32 to vector<8x128xf32>
    %437 = arith.mulf %436, %426 : vector<8x128xf32>
    %438 = arith.addf %434, %437 : vector<8x128xf32>
    %439 = math.absf %438 : vector<8x128xf32>
    %cst_137 = arith.constant 0.000000e+00 : f32
    %440 = vector.broadcast %cst_137 : f32 to vector<8x128xf32>
    %441 = arith.subf %440, %439 : vector<8x128xf32>
    %442 = math.exp %441 : vector<8x128xf32>
    %443 = arith.mulf %442, %442 : vector<8x128xf32>
    %cst_138 = arith.constant 1.000000e+00 : f32
    %444 = vector.broadcast %cst_138 : f32 to vector<8x128xf32>
    %445 = arith.addf %444, %443 : vector<8x128xf32>
    %446 = tpu.reciprocal %445 {approx = true} : vector<8x128xf32> -> vector<8x128xf32>
    %447 = arith.mulf %445, %446 : vector<8x128xf32>
    %cst_139 = arith.constant 2.000000e+00 : f32
    %448 = vector.broadcast %cst_139 : f32 to vector<8x128xf32>
    %449 = arith.subf %448, %447 : vector<8x128xf32>
    %450 = arith.mulf %446, %449 : vector<8x128xf32>
    %cst_140 = arith.constant 1.000000e+00 : f32
    %451 = vector.broadcast %cst_140 : f32 to vector<8x128xf32>
    %452 = arith.subf %451, %442 : vector<8x128xf32>
    %cst_141 = arith.constant 0.000000e+00 : f32
    %453 = vector.broadcast %cst_141 : f32 to vector<8x128xf32>
    %454 = arith.cmpf oge, %438, %453 : vector<8x128xf32>
    %cst_142 = arith.constant 0.000000e+00 : f32
    %455 = vector.broadcast %cst_142 : f32 to vector<8x128xf32>
    %456 = arith.subf %455, %442 : vector<8x128xf32>
    %cst_143 = arith.constant 1.000000e+00 : f32
    %457 = vector.broadcast %cst_143 : f32 to vector<8x128xf32>
    %458 = arith.select %454, %457, %456 : vector<8x128xi1>, vector<8x128xf32>
    %459 = arith.mulf %452, %458 : vector<8x128xf32>
    %460 = arith.mulf %459, %450 : vector<8x128xf32>
    %c8_144 = arith.constant 8 : index
    %461 = memref.load %arg7[%c8_144] : memref<12xf32, #tpu.memory_space<smem>>
    %462 = vector.broadcast %461 : f32 to vector<8x128xf32>
    %463 = arith.mulf %462, %460 : vector<8x128xf32>
    %c8_145 = arith.constant 8 : index
    %464 = memref.load %arg8[%c8_145] : memref<12xf32, #tpu.memory_space<smem>>
    %465 = vector.broadcast %464 : f32 to vector<8x128xf32>
    %466 = arith.addf %463, %465 : vector<8x128xf32>
    %467 = arith.addf %415, %466 : vector<8x128xf32>
    %c8_146 = arith.constant 8 : index
    %468 = memref.load %arg5[%c8_146] : memref<12xf32, #tpu.memory_space<smem>>
    %469 = vector.broadcast %468 : f32 to vector<8x128xf32>
    %470 = arith.mulf %469, %460 : vector<8x128xf32>
    %c8_147 = arith.constant 8 : index
    %471 = memref.load %arg6[%c8_147] : memref<12xf32, #tpu.memory_space<smem>>
    %472 = vector.broadcast %471 : f32 to vector<8x128xf32>
    %473 = arith.addf %470, %472 : vector<8x128xf32>
    %474 = arith.addf %473, %426 : vector<8x128xf32>
    %c22_i32_148 = arith.constant 22 : i32
    %475 = vector.broadcast %c22_i32_148 : i32 to vector<8x128xi32>
    %476 = arith.cmpi sge, %0, %475 : vector<8x128xi32>
    %cst_149 = arith.constant 0.000000e+00 : f32
    %477 = vector.broadcast %cst_149 : f32 to vector<8x128xf32>
    %478 = arith.select %476, %474, %477 : vector<8x128xi1>, vector<8x128xf32>
    %c9 = arith.constant 9 : index
    %479 = memref.load %arg3[%c9] : memref<12xf32, #tpu.memory_space<smem>>
    %c2_i32_150 = arith.constant 2 : i32
    %480 = vector.broadcast %c2_i32_150 : i32 to vector<8x128xi32>
    %481 = arith.cmpi sge, %0, %480 : vector<8x128xi32>
    %c2_i32_151 = arith.constant 2 : i32
    %482 = tpu.dynamic_rotate %478 by %c2_i32_151 dim 1 : vector<8x128xf32>, i32 -> vector<8x128xf32>
    %cst_152 = arith.constant 0.000000e+00 : f32
    %483 = vector.broadcast %cst_152 : f32 to vector<8x128xf32>
    %484 = arith.select %481, %482, %483 : vector<8x128xi1>, vector<8x128xf32>
    %485 = vector.broadcast %479 : f32 to vector<8x128xf32>
    %486 = arith.mulf %485, %484 : vector<8x128xf32>
    %c9_153 = arith.constant 9 : index
    %487 = memref.load %arg4[%c9_153] : memref<12xf32, #tpu.memory_space<smem>>
    %488 = vector.broadcast %487 : f32 to vector<8x128xf32>
    %489 = arith.mulf %488, %478 : vector<8x128xf32>
    %490 = arith.addf %486, %489 : vector<8x128xf32>
    %491 = math.absf %490 : vector<8x128xf32>
    %cst_154 = arith.constant 0.000000e+00 : f32
    %492 = vector.broadcast %cst_154 : f32 to vector<8x128xf32>
    %493 = arith.subf %492, %491 : vector<8x128xf32>
    %494 = math.exp %493 : vector<8x128xf32>
    %495 = arith.mulf %494, %494 : vector<8x128xf32>
    %cst_155 = arith.constant 1.000000e+00 : f32
    %496 = vector.broadcast %cst_155 : f32 to vector<8x128xf32>
    %497 = arith.addf %496, %495 : vector<8x128xf32>
    %498 = tpu.reciprocal %497 {approx = true} : vector<8x128xf32> -> vector<8x128xf32>
    %499 = arith.mulf %497, %498 : vector<8x128xf32>
    %cst_156 = arith.constant 2.000000e+00 : f32
    %500 = vector.broadcast %cst_156 : f32 to vector<8x128xf32>
    %501 = arith.subf %500, %499 : vector<8x128xf32>
    %502 = arith.mulf %498, %501 : vector<8x128xf32>
    %cst_157 = arith.constant 1.000000e+00 : f32
    %503 = vector.broadcast %cst_157 : f32 to vector<8x128xf32>
    %504 = arith.subf %503, %494 : vector<8x128xf32>
    %cst_158 = arith.constant 0.000000e+00 : f32
    %505 = vector.broadcast %cst_158 : f32 to vector<8x128xf32>
    %506 = arith.cmpf oge, %490, %505 : vector<8x128xf32>
    %cst_159 = arith.constant 0.000000e+00 : f32
    %507 = vector.broadcast %cst_159 : f32 to vector<8x128xf32>
    %508 = arith.subf %507, %494 : vector<8x128xf32>
    %cst_160 = arith.constant 1.000000e+00 : f32
    %509 = vector.broadcast %cst_160 : f32 to vector<8x128xf32>
    %510 = arith.select %506, %509, %508 : vector<8x128xi1>, vector<8x128xf32>
    %511 = arith.mulf %504, %510 : vector<8x128xf32>
    %512 = arith.mulf %511, %502 : vector<8x128xf32>
    %c9_161 = arith.constant 9 : index
    %513 = memref.load %arg7[%c9_161] : memref<12xf32, #tpu.memory_space<smem>>
    %514 = vector.broadcast %513 : f32 to vector<8x128xf32>
    %515 = arith.mulf %514, %512 : vector<8x128xf32>
    %c9_162 = arith.constant 9 : index
    %516 = memref.load %arg8[%c9_162] : memref<12xf32, #tpu.memory_space<smem>>
    %517 = vector.broadcast %516 : f32 to vector<8x128xf32>
    %518 = arith.addf %515, %517 : vector<8x128xf32>
    %519 = arith.addf %467, %518 : vector<8x128xf32>
    %c9_163 = arith.constant 9 : index
    %520 = memref.load %arg5[%c9_163] : memref<12xf32, #tpu.memory_space<smem>>
    %521 = vector.broadcast %520 : f32 to vector<8x128xf32>
    %522 = arith.mulf %521, %512 : vector<8x128xf32>
    %c9_164 = arith.constant 9 : index
    %523 = memref.load %arg6[%c9_164] : memref<12xf32, #tpu.memory_space<smem>>
    %524 = vector.broadcast %523 : f32 to vector<8x128xf32>
    %525 = arith.addf %522, %524 : vector<8x128xf32>
    %526 = arith.addf %525, %478 : vector<8x128xf32>
    %c23_i32 = arith.constant 23 : i32
    %527 = vector.broadcast %c23_i32 : i32 to vector<8x128xi32>
    %528 = arith.cmpi sge, %0, %527 : vector<8x128xi32>
    %cst_165 = arith.constant 0.000000e+00 : f32
    %529 = vector.broadcast %cst_165 : f32 to vector<8x128xf32>
    %530 = arith.select %528, %526, %529 : vector<8x128xi1>, vector<8x128xf32>
    %c10 = arith.constant 10 : index
    %531 = memref.load %arg3[%c10] : memref<12xf32, #tpu.memory_space<smem>>
    %c4_i32_166 = arith.constant 4 : i32
    %532 = vector.broadcast %c4_i32_166 : i32 to vector<8x128xi32>
    %533 = arith.cmpi sge, %0, %532 : vector<8x128xi32>
    %c4_i32_167 = arith.constant 4 : i32
    %534 = tpu.dynamic_rotate %530 by %c4_i32_167 dim 1 : vector<8x128xf32>, i32 -> vector<8x128xf32>
    %cst_168 = arith.constant 0.000000e+00 : f32
    %535 = vector.broadcast %cst_168 : f32 to vector<8x128xf32>
    %536 = arith.select %533, %534, %535 : vector<8x128xi1>, vector<8x128xf32>
    %537 = vector.broadcast %531 : f32 to vector<8x128xf32>
    %538 = arith.mulf %537, %536 : vector<8x128xf32>
    %c10_169 = arith.constant 10 : index
    %539 = memref.load %arg4[%c10_169] : memref<12xf32, #tpu.memory_space<smem>>
    %540 = vector.broadcast %539 : f32 to vector<8x128xf32>
    %541 = arith.mulf %540, %530 : vector<8x128xf32>
    %542 = arith.addf %538, %541 : vector<8x128xf32>
    %543 = math.absf %542 : vector<8x128xf32>
    %cst_170 = arith.constant 0.000000e+00 : f32
    %544 = vector.broadcast %cst_170 : f32 to vector<8x128xf32>
    %545 = arith.subf %544, %543 : vector<8x128xf32>
    %546 = math.exp %545 : vector<8x128xf32>
    %547 = arith.mulf %546, %546 : vector<8x128xf32>
    %cst_171 = arith.constant 1.000000e+00 : f32
    %548 = vector.broadcast %cst_171 : f32 to vector<8x128xf32>
    %549 = arith.addf %548, %547 : vector<8x128xf32>
    %550 = tpu.reciprocal %549 {approx = true} : vector<8x128xf32> -> vector<8x128xf32>
    %551 = arith.mulf %549, %550 : vector<8x128xf32>
    %cst_172 = arith.constant 2.000000e+00 : f32
    %552 = vector.broadcast %cst_172 : f32 to vector<8x128xf32>
    %553 = arith.subf %552, %551 : vector<8x128xf32>
    %554 = arith.mulf %550, %553 : vector<8x128xf32>
    %cst_173 = arith.constant 1.000000e+00 : f32
    %555 = vector.broadcast %cst_173 : f32 to vector<8x128xf32>
    %556 = arith.subf %555, %546 : vector<8x128xf32>
    %cst_174 = arith.constant 0.000000e+00 : f32
    %557 = vector.broadcast %cst_174 : f32 to vector<8x128xf32>
    %558 = arith.cmpf oge, %542, %557 : vector<8x128xf32>
    %cst_175 = arith.constant 0.000000e+00 : f32
    %559 = vector.broadcast %cst_175 : f32 to vector<8x128xf32>
    %560 = arith.subf %559, %546 : vector<8x128xf32>
    %cst_176 = arith.constant 1.000000e+00 : f32
    %561 = vector.broadcast %cst_176 : f32 to vector<8x128xf32>
    %562 = arith.select %558, %561, %560 : vector<8x128xi1>, vector<8x128xf32>
    %563 = arith.mulf %556, %562 : vector<8x128xf32>
    %564 = arith.mulf %563, %554 : vector<8x128xf32>
    %c10_177 = arith.constant 10 : index
    %565 = memref.load %arg7[%c10_177] : memref<12xf32, #tpu.memory_space<smem>>
    %566 = vector.broadcast %565 : f32 to vector<8x128xf32>
    %567 = arith.mulf %566, %564 : vector<8x128xf32>
    %c10_178 = arith.constant 10 : index
    %568 = memref.load %arg8[%c10_178] : memref<12xf32, #tpu.memory_space<smem>>
    %569 = vector.broadcast %568 : f32 to vector<8x128xf32>
    %570 = arith.addf %567, %569 : vector<8x128xf32>
    %571 = arith.addf %519, %570 : vector<8x128xf32>
    %c10_179 = arith.constant 10 : index
    %572 = memref.load %arg5[%c10_179] : memref<12xf32, #tpu.memory_space<smem>>
    %573 = vector.broadcast %572 : f32 to vector<8x128xf32>
    %574 = arith.mulf %573, %564 : vector<8x128xf32>
    %c10_180 = arith.constant 10 : index
    %575 = memref.load %arg6[%c10_180] : memref<12xf32, #tpu.memory_space<smem>>
    %576 = vector.broadcast %575 : f32 to vector<8x128xf32>
    %577 = arith.addf %574, %576 : vector<8x128xf32>
    %578 = arith.addf %577, %530 : vector<8x128xf32>
    %c26_i32 = arith.constant 26 : i32
    %579 = vector.broadcast %c26_i32 : i32 to vector<8x128xi32>
    %580 = arith.cmpi sge, %0, %579 : vector<8x128xi32>
    %cst_181 = arith.constant 0.000000e+00 : f32
    %581 = vector.broadcast %cst_181 : f32 to vector<8x128xf32>
    %582 = arith.select %580, %578, %581 : vector<8x128xi1>, vector<8x128xf32>
    %c11 = arith.constant 11 : index
    %583 = memref.load %arg3[%c11] : memref<12xf32, #tpu.memory_space<smem>>
    %c8_i32_182 = arith.constant 8 : i32
    %584 = vector.broadcast %c8_i32_182 : i32 to vector<8x128xi32>
    %585 = arith.cmpi sge, %0, %584 : vector<8x128xi32>
    %c8_i32_183 = arith.constant 8 : i32
    %586 = tpu.dynamic_rotate %582 by %c8_i32_183 dim 1 : vector<8x128xf32>, i32 -> vector<8x128xf32>
    %cst_184 = arith.constant 0.000000e+00 : f32
    %587 = vector.broadcast %cst_184 : f32 to vector<8x128xf32>
    %588 = arith.select %585, %586, %587 : vector<8x128xi1>, vector<8x128xf32>
    %589 = vector.broadcast %583 : f32 to vector<8x128xf32>
    %590 = arith.mulf %589, %588 : vector<8x128xf32>
    %c11_185 = arith.constant 11 : index
    %591 = memref.load %arg4[%c11_185] : memref<12xf32, #tpu.memory_space<smem>>
    %592 = vector.broadcast %591 : f32 to vector<8x128xf32>
    %593 = arith.mulf %592, %582 : vector<8x128xf32>
    %594 = arith.addf %590, %593 : vector<8x128xf32>
    %595 = math.absf %594 : vector<8x128xf32>
    %cst_186 = arith.constant 0.000000e+00 : f32
    %596 = vector.broadcast %cst_186 : f32 to vector<8x128xf32>
    %597 = arith.subf %596, %595 : vector<8x128xf32>
    %598 = math.exp %597 : vector<8x128xf32>
    %599 = arith.mulf %598, %598 : vector<8x128xf32>
    %cst_187 = arith.constant 1.000000e+00 : f32
    %600 = vector.broadcast %cst_187 : f32 to vector<8x128xf32>
    %601 = arith.addf %600, %599 : vector<8x128xf32>
    %602 = tpu.reciprocal %601 {approx = true} : vector<8x128xf32> -> vector<8x128xf32>
    %603 = arith.mulf %601, %602 : vector<8x128xf32>
    %cst_188 = arith.constant 2.000000e+00 : f32
    %604 = vector.broadcast %cst_188 : f32 to vector<8x128xf32>
    %605 = arith.subf %604, %603 : vector<8x128xf32>
    %606 = arith.mulf %602, %605 : vector<8x128xf32>
    %cst_189 = arith.constant 1.000000e+00 : f32
    %607 = vector.broadcast %cst_189 : f32 to vector<8x128xf32>
    %608 = arith.subf %607, %598 : vector<8x128xf32>
    %cst_190 = arith.constant 0.000000e+00 : f32
    %609 = vector.broadcast %cst_190 : f32 to vector<8x128xf32>
    %610 = arith.cmpf oge, %594, %609 : vector<8x128xf32>
    %cst_191 = arith.constant 0.000000e+00 : f32
    %611 = vector.broadcast %cst_191 : f32 to vector<8x128xf32>
    %612 = arith.subf %611, %598 : vector<8x128xf32>
    %cst_192 = arith.constant 1.000000e+00 : f32
    %613 = vector.broadcast %cst_192 : f32 to vector<8x128xf32>
    %614 = arith.select %610, %613, %612 : vector<8x128xi1>, vector<8x128xf32>
    %615 = arith.mulf %608, %614 : vector<8x128xf32>
    %616 = arith.mulf %615, %606 : vector<8x128xf32>
    %c11_193 = arith.constant 11 : index
    %617 = memref.load %arg7[%c11_193] : memref<12xf32, #tpu.memory_space<smem>>
    %618 = vector.broadcast %617 : f32 to vector<8x128xf32>
    %619 = arith.mulf %618, %616 : vector<8x128xf32>
    %c11_194 = arith.constant 11 : index
    %620 = memref.load %arg8[%c11_194] : memref<12xf32, #tpu.memory_space<smem>>
    %621 = vector.broadcast %620 : f32 to vector<8x128xf32>
    %622 = arith.addf %619, %621 : vector<8x128xf32>
    %623 = arith.addf %571, %622 : vector<8x128xf32>
    %cst_195 = arith.constant 0.000000e+00 : f32
    %624 = vector.broadcast %cst_195 : f32 to vector<8x128xf32>
    %625 = arith.maximumf %623, %624 : vector<8x128xf32>
    %c0_196 = arith.constant 0 : index
    %626 = memref.load %arg9[%c0_196] : memref<2xf32, #tpu.memory_space<smem>>
    %627 = vector.broadcast %626 : f32 to vector<8x128xf32>
    %628 = arith.mulf %627, %625 : vector<8x128xf32>
    %cst_197 = arith.constant 0.000000e+00 : f32
    %629 = vector.broadcast %cst_197 : f32 to vector<8x128xf32>
    %630 = arith.maximumf %628, %629 : vector<8x128xf32>
    %c1_198 = arith.constant 1 : index
    %631 = memref.load %arg9[%c1_198] : memref<2xf32, #tpu.memory_space<smem>>
    %632 = vector.broadcast %631 : f32 to vector<8x128xf32>
    %633 = arith.mulf %632, %630 : vector<8x128xf32>
    %c45_i32 = arith.constant 45 : i32
    %634 = vector.broadcast %c45_i32 : i32 to vector<8x128xi32>
    %635 = arith.cmpi sge, %0, %634 : vector<8x128xi32>
    %cst_199 = arith.constant 0.000000e+00 : f32
    %636 = vector.broadcast %cst_199 : f32 to vector<8x128xf32>
    %637 = arith.mulf %633, %636 : vector<8x128xf32>
    %cst_200 = arith.constant 1.000000e+00 : f32
    %638 = vector.broadcast %cst_200 : f32 to vector<8x128xf32>
    %639 = arith.addf %637, %638 : vector<8x128xf32>
    %cst_201 = arith.constant 0.000000e+00 : f32
    %640 = vector.broadcast %cst_201 : f32 to vector<8x128xf32>
    %641 = arith.select %635, %639, %640 : vector<8x128xi1>, vector<8x128xf32>
    %c0_202 = arith.constant 0 : index
    %c0_203 = arith.constant 0 : index
    %642 = vector.load %arg10[%c0_202, %c0_203] : memref<128x128xf32, #tpu.memory_space<vmem>>, vector<128x128xf32>
    %cst_204 = arith.constant dense<0.000000e+00> : vector<8x128xf32>
    %643 = tpu.matmul %641, %642, %cst_204 {dimension_numbers = #tpu.dot_dimension_numbers<[1], [0], [0], [1], [0, 0, 1, 1], [], []>} : vector<8x128xf32>, vector<128x128xf32>, vector<8x128xf32> -> vector<8x128xf32>
    %c0_205 = arith.constant 0 : index
    %c0_206 = arith.constant 0 : index
    %644 = vector.load %arg11[%c0_205, %c0_206] : memref<1x128xf32, #tpu.memory_space<vmem>>, vector<1x128xf32>
    %645 = vector.broadcast %644 : vector<1x128xf32> to vector<8x128xf32>
    %646 = arith.addf %643, %645 : vector<8x128xf32>
    %c0_207 = arith.constant 0 : index
    %c0_208 = arith.constant 0 : index
    %647 = vector.load %arg12[%c0_207, %c0_208] : memref<8x128xf32, #tpu.memory_space<vmem>>, vector<8x128xf32>
    tpu.vector_store %arg12[%c0_207, %c0_208], %646 {strides = array<i32>} : memref<8x128xf32, #tpu.memory_space<vmem>>, vector<8x128xf32>,
    return
  }
  func.func @transform_0(%arg0: i32) -> (i32, i32) {
    %c0_i32 = arith.constant 0 : i32
    %c0_i32_0 = arith.constant 0 : i32
    return %arg0, %c0_i32 : i32, i32
  }
  func.func @transform_1(%arg0: i32) -> i32 {
    %c0_i32 = arith.constant 0 : i32
    %c0_i32_0 = arith.constant 0 : i32
    return %c0_i32 : i32
  }
  func.func @transform_2(%arg0: i32) -> i32 {
    %c0_i32 = arith.constant 0 : i32
    %c0_i32_0 = arith.constant 0 : i32
    return %c0_i32 : i32
  }
  func.func @transform_3(%arg0: i32) -> i32 {
    %c0_i32 = arith.constant 0 : i32
    %c0_i32_0 = arith.constant 0 : i32
    return %c0_i32 : i32
  }
  func.func @transform_4(%arg0: i32) -> i32 {
    %c0_i32 = arith.constant 0 : i32
    %c0_i32_0 = arith.constant 0 : i32
    return %c0_i32 : i32
  }
  func.func @transform_5(%arg0: i32) -> i32 {
    %c0_i32 = arith.constant 0 : i32
    %c0_i32_0 = arith.constant 0 : i32
    return %c0_i32 : i32
  }
  func.func @transform_6(%arg0: i32) -> i32 {
    %c0_i32 = arith.constant 0 : i32
    %c0_i32_0 = arith.constant 0 : i32
    return %c0_i32 : i32
  }
  func.func @transform_7(%arg0: i32) -> i32 {
    %c0_i32 = arith.constant 0 : i32
    %c0_i32_0 = arith.constant 0 : i32
    return %c0_i32 : i32
  }
  func.func @transform_8(%arg0: i32) -> i32 {
    %c0_i32 = arith.constant 0 : i32
    %c0_i32_0 = arith.constant 0 : i32
    return %c0_i32 : i32
  }
  func.func @transform_9(%arg0: i32) -> (i32, i32) {
    %c0_i32 = arith.constant 0 : i32
    %c0_i32_0 = arith.constant 0 : i32
    %c0_i32_1 = arith.constant 0 : i32
    return %c0_i32, %c0_i32_0 : i32, i32
  }
  func.func @transform_10(%arg0: i32) -> (i32, i32) {
    %c0_i32 = arith.constant 0 : i32
    %c0_i32_0 = arith.constant 0 : i32
    %c0_i32_1 = arith.constant 0 : i32
    return %c0_i32, %c0_i32_0 : i32, i32
  }
  func.func @transform_11(%arg0: i32) -> (i32, i32) {
    %c0_i32 = arith.constant 0 : i32
    %c0_i32_0 = arith.constant 0 : i32
    return %arg0, %c0_i32 : i32, i32
  }
}

</mosaic_0001>

<llo_original>
// kernel: wavenet_classifier_forward.1
$region0: #{wavenet_classifier_forward.1}
  #allocation0 [shape = 'u32[]', space=smem, size = 0x4, offset = 0x4, fixed_abs, tag = 'smem constant byte address 0x4 - core index']
  #allocation1 [shape = 'u32[144,128]{1,0:T(1,128)}', space=vmem, size = 0x12000, scoped, tag = 'internal scratch']
  %s0 = inlined_call_operand.vmem [shape: f32[8,128], index: 0, kind: input, shape index: {}]
  %s1 = inlined_call_operand.vmem [shape: f32[2], index: 1, kind: input, shape index: {}]
  %s2 = inlined_call_operand.vmem [shape: f32[12], index: 2, kind: input, shape index: {}]
  %s3 = inlined_call_operand.vmem [shape: f32[12], index: 3, kind: input, shape index: {}]
  %s4 = inlined_call_operand.vmem [shape: f32[12], index: 4, kind: input, shape index: {}]
  %s5 = inlined_call_operand.vmem [shape: f32[12], index: 5, kind: input, shape index: {}]
  %s6 = inlined_call_operand.vmem [shape: f32[12], index: 6, kind: input, shape index: {}]
  %s7 = inlined_call_operand.vmem [shape: f32[12], index: 7, kind: input, shape index: {}]
  %s8 = inlined_call_operand.vmem [shape: f32[2], index: 8, kind: input, shape index: {}]
  %s9 = inlined_call_operand.vmem [shape: f32[128,128], index: 9, kind: input, shape index: {}]
  %s10 = inlined_call_operand.vmem [shape: f32[1,128], index: 10, kind: input, shape index: {}]
  %s11 = inlined_call_operand.vmem [shape: f32[8,128], index: 11, kind: output, shape index: {}]
  %s12 = sld [smem:[#allocation0]]
  $region86: #{wavenet_classifier_forward.1} parent=0
    _
  %s14 = ssub.s32 1, %s12
  %s15 = scalar_select 0, %s14, %s12
  $region1: #{wavenet_classifier_forward.1} parent=0
    #allocation2 [shape = 'u8[512]{0}', space=smem, size = 0x200, scoped, tag = 'input window, operand 1, single buffered']
    #allocation3 [shape = 's32[1]{0}', space=sflag, size = 0x4, scoped, tag = 'scoped memory for wavenet_classifier_forward.1']
    #allocation4 [shape = 'u8[512]{0}', space=smem, size = 0x200, scoped, tag = 'input window, operand 2, single buffered']
    #allocation5 [shape = 's32[1]{0}', space=sflag, size = 0x4, scoped, tag = 'scoped memory for wavenet_classifier_forward.1']
    #allocation6 [shape = 'u8[512]{0}', space=smem, size = 0x200, scoped, tag = 'input window, operand 3, single buffered']
    #allocation7 [shape = 'u8[512]{0}', space=smem, size = 0x200, scoped, tag = 'input window, operand 4, single buffered']
    #allocation8 [shape = 's32[1]{0}', space=sflag, size = 0x4, scoped, tag = 'scoped memory for wavenet_classifier_forward.1']
    #allocation9 [shape = 'u8[512]{0}', space=smem, size = 0x200, scoped, tag = 'input window, operand 5, single buffered']
    #allocation10 [shape = 'u8[512]{0}', space=smem, size = 0x200, scoped, tag = 'input window, operand 6, single buffered']
    #allocation11 [shape = 's32[1]{0}', space=sflag, size = 0x4, scoped, tag = 'scoped memory for wavenet_classifier_forward.1']
    #allocation12 [shape = 'u8[512]{0}', space=smem, size = 0x200, scoped, tag = 'input window, operand 7, single buffered']
    #allocation13 [shape = 'u8[512]{0}', space=smem, size = 0x200, scoped, tag = 'input window, operand 8, single buffered']
    #allocation14 [shape = 's32[1]{0}', space=sflag, size = 0x4, scoped, tag = 'scoped memory for wavenet_classifier_forward.1']
    %16 = vsyncpa [#allocation3], 0
    %17 = vsyncpa [#allocation5], 0
    %18 = vsyncpa [#allocation8], 0
    %19 = vsyncpa [#allocation11], 0
    %20 = vsyncpa [#allocation14], 0
    // Predicated region
    $region2: #{wavenet_classifier_forward.1} parent=1 // pred_check
      _
    $region3: #{wavenet_classifier_forward.1} parent=1 // pred_check_branch
      %22 = sbr.rel (0) target = $region5
    $region4: #{wavenet_classifier_forward.1} parent=1 // pred_region
      _
    $region5: #{wavenet_classifier_forward.1} parent=1 // pred_fallthru
      _
    // Predicated region
    $region6: #{wavenet_classifier_forward.1} parent=1 // pred_check
      _
    $region7: #{wavenet_classifier_forward.1} parent=1 // pred_check_branch
      %24 = sbr.rel (0) target = $region9
    $region8: #{wavenet_classifier_forward.1} parent=1 // pred_region
      %s26 = ssub.s32 16, 16
      %27 = vsyncadd [#allocation3], %s26
      %s29 = sshll.u32 %s1, 4
      %s30 = int_to_ptr.vmem [resolvable:$true] %s29
      %32 = dma.vmem_to_smem %s30, 16, [#allocation2], [#allocation3]
    $region9: #{wavenet_classifier_forward.1} parent=1 // pred_fallthru
      _
    // Predicated region
    $region10: #{wavenet_classifier_forward.1} parent=1 // pred_check
      _
    $region11: #{wavenet_classifier_forward.1} parent=1 // pred_check_branch
      %34 = sbr.rel (0) target = $region13
    $region12: #{wavenet_classifier_forward.1} parent=1 // pred_region
      %s36 = ssub.s32 16, 16
      %37 = vsyncadd [#allocation5], %s36
      %s39 = sshll.u32 %s2, 4
      %s40 = int_to_ptr.vmem [resolvable:$true] %s39
      %42 = dma.vmem_to_smem %s40, 16, [#allocation4], [#allocation5]
    $region13: #{wavenet_classifier_forward.1} parent=1 // pred_fallthru
      _
    // Predicated region
    $region14: #{wavenet_classifier_forward.1} parent=1 // pred_check
      _
    $region15: #{wavenet_classifier_forward.1} parent=1 // pred_check_branch
      %44 = sbr.rel (0) target = $region17
    $region16: #{wavenet_classifier_forward.1} parent=1 // pred_region
      %s46 = ssub.s32 16, 16
      %47 = vsyncadd [#allocation5], %s46
      %s49 = sshll.u32 %s3, 4
      %s50 = int_to_ptr.vmem [resolvable:$true] %s49
      %52 = dma.vmem_to_smem %s50, 16, [#allocation6], [#allocation5]
    $region17: #{wavenet_classifier_forward.1} parent=1 // pred_fallthru
      _
    // Predicated region
    $region18: #{wavenet_classifier_forward.1} parent=1 // pred_check
      _
    $region19: #{wavenet_classifier_forward.1} parent=1 // pred_check_branch
      %54 = sbr.rel (0) target = $region21
    $region20: #{wavenet_classifier_forward.1} parent=1 // pred_region
      %s56 = ssub.s32 16, 16
      %57 = vsyncadd [#allocation8], %s56
      %s59 = sshll.u32 %s4, 4
      %s60 = int_to_ptr.vmem [resolvable:$true] %s59
      %62 = dma.vmem_to_smem %s60, 16, [#allocation7], [#allocation8]
    $region21: #{wavenet_classifier_forward.1} parent=1 // pred_fallthru
      _
    // Predicated region
    $region22: #{wavenet_classifier_forward.1} parent=1 // pred_check
      _
    $region23: #{wavenet_classifier_forward.1} parent=1 // pred_check_branch
      %64 = sbr.rel (0) target = $region25
    $region24: #{wavenet_classifier_forward.1} parent=1 // pred_region
      %s66 = ssub.s32 16, 16
      %67 = vsyncadd [#allocation8], %s66
      %s69 = sshll.u32 %s5, 4
      %s70 = int_to_ptr.vmem [resolvable:$true] %s69
      %72 = dma.vmem_to_smem %s70, 16, [#allocation9], [#allocation8]
    $region25: #{wavenet_classifier_forward.1} parent=1 // pred_fallthru
      _
    // Predicated region
    $region26: #{wavenet_classifier_forward.1} parent=1 // pred_check
      _
    $region27: #{wavenet_classifier_forward.1} parent=1 // pred_check_branch
      %74 = sbr.rel (0) target = $region29
    $region28: #{wavenet_classifier_forward.1} parent=1 // pred_region
      %s76 = ssub.s32 16, 16
      %77 = vsyncadd [#allocation11], %s76
      %s79 = sshll.u32 %s6, 4
      %s80 = int_to_ptr.vmem [resolvable:$true] %s79
      %82 = dma.vmem_to_smem %s80, 16, [#allocation10], [#allocation11]
    $region29: #{wavenet_classifier_forward.1} parent=1 // pred_fallthru
      _
    // Predicated region
    $region30: #{wavenet_classifier_forward.1} parent=1 // pred_check
      _
    $region31: #{wavenet_classifier_forward.1} parent=1 // pred_check_branch
      %84 = sbr.rel (0) target = $region33
    $region32: #{wavenet_classifier_forward.1} parent=1 // pred_region
      %s86 = ssub.s32 16, 16
      %87 = vsyncadd [#allocation11], %s86
      %s89 = sshll.u32 %s7, 4
      %s90 = int_to_ptr.vmem [resolvable:$true] %s89
      %92 = dma.vmem_to_smem %s90, 16, [#allocation12], [#allocation11]
    $region33: #{wavenet_classifier_forward.1} parent=1 // pred_fallthru
      _
    // Predicated region
    $region34: #{wavenet_classifier_forward.1} parent=1 // pred_check
      _
    $region35: #{wavenet_classifier_forward.1} parent=1 // pred_check_branch
      %94 = sbr.rel (0) target = $region37
    $region36: #{wavenet_classifier_forward.1} parent=1 // pred_region
      %s96 = ssub.s32 16, 16
      %97 = vsyncadd [#allocation14], %s96
      %s99 = sshll.u32 %s8, 4
      %s100 = int_to_ptr.vmem [resolvable:$true] %s99
      %102 = dma.vmem_to_smem %s100, 16, [#allocation13], [#allocation14]
    $region37: #{wavenet_classifier_forward.1} parent=1 // pred_fallthru
      _
    // Predicated region
    $region38: #{wavenet_classifier_forward.1} parent=1 // pred_check
      _
    $region39: #{wavenet_classifier_forward.1} parent=1 // pred_check_branch
      %104 = sbr.rel (0) target = $region41
    $region40: #{wavenet_classifier_forward.1} parent=1 // pred_region
      _
    $region41: #{wavenet_classifier_forward.1} parent=1 // pred_fallthru
      _
    // Predicated region
    $region42: #{wavenet_classifier_forward.1} parent=1 // pred_check
      _
    $region43: #{wavenet_classifier_forward.1} parent=1 // pred_check_branch
      %106 = sbr.rel (0) target = $region45
    $region44: #{wavenet_classifier_forward.1} parent=1 // pred_region
      _
    $region45: #{wavenet_classifier_forward.1} parent=1 // pred_fallthru
      _
    // Predicated region
    $region46: #{wavenet_classifier_forward.1} parent=1 // pred_check
      _
    $region47: #{wavenet_classifier_forward.1} parent=1 // pred_check_branch
      %108 = sbr.rel (0) target = $region49
    $region48: #{wavenet_classifier_forward.1} parent=1 // pred_region
      %109 = dma.done [#allocation3], 16
    $region49: #{wavenet_classifier_forward.1} parent=1 // pred_fallthru
      _
    // Predicated region
    $region50: #{wavenet_classifier_forward.1} parent=1 // pred_check
      _
    $region51: #{wavenet_classifier_forward.1} parent=1 // pred_check_branch
      %111 = sbr.rel (0) target = $region53
    $region52: #{wavenet_classifier_forward.1} parent=1 // pred_region
      %112 = dma.done [#allocation5], 16
    $region53: #{wavenet_classifier_forward.1} parent=1 // pred_fallthru
      _
    // Predicated region
    $region54: #{wavenet_classifier_forward.1} parent=1 // pred_check
      _
    $region55: #{wavenet_classifier_forward.1} parent=1 // pred_check_branch
      %114 = sbr.rel (0) target = $region57
    $region56: #{wavenet_classifier_forward.1} parent=1 // pred_region
      %115 = dma.done [#allocation5], 16
    $region57: #{wavenet_classifier_forward.1} parent=1 // pred_fallthru
      _
    // Predicated region
    $region58: #{wavenet_classifier_forward.1} parent=1 // pred_check
      _
    $region59: #{wavenet_classifier_forward.1} parent=1 // pred_check_branch
      %117 = sbr.rel (0) target = $region61
    $region60: #{wavenet_classifier_forward.1} parent=1 // pred_region
      %118 = dma.done [#allocation8], 16
    $region61: #{wavenet_classifier_forward.1} parent=1 // pred_fallthru
      _
    // Predicated region
    $region62: #{wavenet_classifier_forward.1} parent=1 // pred_check
      _
    $region63: #{wavenet_classifier_forward.1} parent=1 // pred_check_branch
      %120 = sbr.rel (0) target = $region65
    $region64: #{wavenet_classifier_forward.1} parent=1 // pred_region
      %121 = dma.done [#allocation8], 16
    $region65: #{wavenet_classifier_forward.1} parent=1 // pred_fallthru
      _
    // Predicated region
    $region66: #{wavenet_classifier_forward.1} parent=1 // pred_check
      _
    $region67: #{wavenet_classifier_forward.1} parent=1 // pred_check_branch
      %123 = sbr.rel (0) target = $region69
    $region68: #{wavenet_classifier_forward.1} parent=1 // pred_region
      %124 = dma.done [#allocation11], 16
    $region69: #{wavenet_classifier_forward.1} parent=1 // pred_fallthru
      _
    // Predicated region
    $region70: #{wavenet_classifier_forward.1} parent=1 // pred_check
      _
    $region71: #{wavenet_classifier_forward.1} parent=1 // pred_check_branch
      %126 = sbr.rel (0) target = $region73
    $region72: #{wavenet_classifier_forward.1} parent=1 // pred_region
      %127 = dma.done [#allocation11], 16
    $region73: #{wavenet_classifier_forward.1} parent=1 // pred_fallthru
      _
    // Predicated region
    $region74: #{wavenet_classifier_forward.1} parent=1 // pred_check
      _
    $region75: #{wavenet_classifier_forward.1} parent=1 // pred_check_branch
      %129 = sbr.rel (0) target = $region77
    $region76: #{wavenet_classifier_forward.1} parent=1 // pred_region
      %130 = dma.done [#allocation14], 16
    $region77: #{wavenet_classifier_forward.1} parent=1 // pred_fallthru
      _
    %131 = sfence
    %v132 = vlaneseq
    %v133 = vand.u32 %v132, 127
    %v134 = vld [vmem:[%s0] sm:$0xff]
    %s135 = sld [smem:[#allocation2]]
    %vm136 = vcmp.ge.s32.totalorder %v133, 1
    %137 = vrot.lane.b32.xlu0 %v134, 1
    %v138 = vpop.permute.xlu0 %137
    %v139 = vsel %vm136, %v138, 0.0
    %v140 = vstv %s135
    %v141 = vmul.f32 %v140, %v139
    %s142 = sld [smem:[#allocation2 + $0x1]]
    %v143 = vstv %s142
    %v144 = vmul.f32 %v143, %v134
    %v145 = vadd.f32 %v141, %v144
    %s146 = sld [smem:[#allocation4]]
    %147 = vrot.lane.b32.xlu0 %v145, 1
    %v148 = vpop.permute.xlu0 %147
    %v149 = vsel %vm136, %v148, 0.0
    %v150 = vstv %s146
    %v151 = vmul.f32 %v150, %v149
    %s152 = sld [smem:[#allocation6]]
    %v153 = vstv %s152
    %v154 = vmul.f32 %v153, %v145
    %v155 = vadd.f32 %v151, %v154
    %v156 = vand.u32 2147483647, %v155
    %v157 = vsub.f32 0.0, %v156
    %v158 = vmul.f32 %v157, 1.442695
    %v159 = vpow.pop %v158
    %v160 = vmul.f32 %v159, %v159
    %v161 = vadd.f32 %v160, 1.0
    %v162 = vrcp.pop %v161
    %v163 = vmul.f32 %v161, %v162
    %v164 = vsub.f32 2.0, %v163
    %v165 = vmul.f32 %v162, %v164
    %v166 = vsub.f32 1.0, %v159
    %vm167 = vcmp.ge.f32.partialorder %v155, 0.0
    %v168 = vsub.f32 0.0, %v159
    %v169 = vsel %vm167, 1.0, %v168
    %v170 = vmul.f32 %v166, %v169
    %v171 = vmul.f32 %v170, %v165
    %s172 = sld [smem:[#allocation10]]
    %v173 = vstv %s172
    %v174 = vmul.f32 %v173, %v171
    %s175 = sld [smem:[#allocation12]]
    %v176 = vstv %s175
    %v177 = vadd.f32 %v174, %v176
    %v178 = vadd.f32 %v177, 0.0
    %s179 = sld [smem:[#allocation7]]
    %v180 = vstv %s179
    %v181 = vmul.f32 %v180, %v171
    %s182 = sld [smem:[#allocation9]]
    %v183 = vstv %s182
    %v184 = vadd.f32 %v181, %v183
    %v185 = vadd.f32 %v184, %v145
    %s186 = sld [smem:[#allocation4 + $0x1]]
    %vm187 = vcmp.ge.s32.totalorder %v133, 2
    %188 = vrot.lane.b32.xlu0 %v185, 2
    %v189 = vpop.permute.xlu0 %188
    %v190 = vsel %vm187, %v189, 0.0
    %v191 = vstv %s186
    %v192 = vmul.f32 %v191, %v190
    %s193 = sld [smem:[#allocation6 + $0x1]]
    %v194 = vstv %s193
    %v195 = vmul.f32 %v194, %v185
    %v196 = vadd.f32 %v192, %v195
    %v197 = vand.u32 2147483647, %v196
    %v198 = vsub.f32 0.0, %v197
    %v199 = vmul.f32 %v198, 1.442695
    %v200 = vpow.pop %v199
    %v201 = vmul.f32 %v200, %v200
    %v202 = vadd.f32 %v201, 1.0
    %v203 = vrcp.pop %v202
    %v204 = vmul.f32 %v202, %v203
    %v205 = vsub.f32 2.0, %v204
    %v206 = vmul.f32 %v203, %v205
    %v207 = vsub.f32 1.0, %v200
    %vm208 = vcmp.ge.f32.partialorder %v196, 0.0
    %v209 = vsub.f32 0.0, %v200
    %v210 = vsel %vm208, 1.0, %v209
    %v211 = vmul.f32 %v207, %v210
    %v212 = vmul.f32 %v211, %v206
    %s213 = sld [smem:[#allocation10 + $0x1]]
    %v214 = vstv %s213
    %v215 = vmul.f32 %v214, %v212
    %s216 = sld [smem:[#allocation12 + $0x1]]
    %v217 = vstv %s216
    %v218 = vadd.f32 %v215, %v217
    %v219 = vadd.f32 %v178, %v218
    %s220 = sld [smem:[#allocation7 + $0x1]]
    %v221 = vstv %s220
    %v222 = vmul.f32 %v221, %v212
    %s223 = sld [smem:[#allocation9 + $0x1]]
    %v224 = vstv %s223
    %v225 = vadd.f32 %v222, %v224
    %v226 = vadd.f32 %v225, %v185
    %v227 = vsel %vm136, %v226, 0.0
    %s228 = sld [smem:[#allocation4 + $0x2]]
    %vm229 = vcmp.ge.s32.totalorder %v133, 4
    %230 = vrot.lane.b32.xlu0 %v227, 4
    %v231 = vpop.permute.xlu0 %230
    %v232 = vsel %vm229, %v231, 0.0
    %v233 = vstv %s228
    %v234 = vmul.f32 %v233, %v232
    %s235 = sld [smem:[#allocation6 + $0x2]]
    %v236 = vstv %s235
    %v237 = vmul.f32 %v236, %v227
    %v238 = vadd.f32 %v234, %v237
    %v239 = vand.u32 2147483647, %v238
    %v240 = vsub.f32 0.0, %v239
    %v241 = vmul.f32 %v240, 1.442695
    %v242 = vpow.pop %v241
    %v243 = vmul.f32 %v242, %v242
    %v244 = vadd.f32 %v243, 1.0
    %v245 = vrcp.pop %v244
    %v246 = vmul.f32 %v244, %v245
    %v247 = vsub.f32 2.0, %v246
    %v248 = vmul.f32 %v245, %v247
    %v249 = vsub.f32 1.0, %v242
    %vm250 = vcmp.ge.f32.partialorder %v238, 0.0
    %v251 = vsub.f32 0.0, %v242
    %v252 = vsel %vm250, 1.0, %v251
    %v253 = vmul.f32 %v249, %v252
    %v254 = vmul.f32 %v253, %v248
    %s255 = sld [smem:[#allocation10 + $0x2]]
    %v256 = vstv %s255
    %v257 = vmul.f32 %v256, %v254
    %s258 = sld [smem:[#allocation12 + $0x2]]
    %v259 = vstv %s258
    %v260 = vadd.f32 %v257, %v259
    %v261 = vadd.f32 %v219, %v260
    %s262 = sld [smem:[#allocation7 + $0x2]]
    %v263 = vstv %s262
    %v264 = vmul.f32 %v263, %v254
    %s265 = sld [smem:[#allocation9 + $0x2]]
    %v266 = vstv %s265
    %v267 = vadd.f32 %v264, %v266
    %v268 = vadd.f32 %v267, %v227
    %v269 = vsel %vm229, %v268, 0.0
    %s270 = sld [smem:[#allocation4 + $0x3]]
    %vm271 = vcmp.ge.s32.totalorder %v133, 8
    %272 = vrot.lane.b32.xlu0 %v269, 8
    %v273 = vpop.permute.xlu0 %272
    %v274 = vsel %vm271, %v273, 0.0
    %v275 = vstv %s270
    %v276 = vmul.f32 %v275, %v274
    %s277 = sld [smem:[#allocation6 + $0x3]]
    %v278 = vstv %s277
    %v279 = vmul.f32 %v278, %v269
    %v280 = vadd.f32 %v276, %v279
    %v281 = vand.u32 2147483647, %v280
    %v282 = vsub.f32 0.0, %v281
    %v283 = vmul.f32 %v282, 1.442695
    %v284 = vpow.pop %v283
    %v285 = vmul.f32 %v284, %v284
    %v286 = vadd.f32 %v285, 1.0
    %v287 = vrcp.pop %v286
    %v288 = vmul.f32 %v286, %v287
    %v289 = vsub.f32 2.0, %v288
    %v290 = vmul.f32 %v287, %v289
    %v291 = vsub.f32 1.0, %v284
    %vm292 = vcmp.ge.f32.partialorder %v280, 0.0
    %v293 = vsub.f32 0.0, %v284
    %v294 = vsel %vm292, 1.0, %v293
    %v295 = vmul.f32 %v291, %v294
    %v296 = vmul.f32 %v295, %v290
    %s297 = sld [smem:[#allocation10 + $0x3]]
    %v298 = vstv %s297
    %v299 = vmul.f32 %v298, %v296
    %s300 = sld [smem:[#allocation12 + $0x3]]
    %v301 = vstv %s300
    %v302 = vadd.f32 %v299, %v301
    %v303 = vadd.f32 %v261, %v302
    %s304 = sld [smem:[#allocation7 + $0x3]]
    %v305 = vstv %s304
    %v306 = vmul.f32 %v305, %v296
    %s307 = sld [smem:[#allocation9 + $0x3]]
    %v308 = vstv %s307
    %v309 = vadd.f32 %v306, %v308
    %v310 = vadd.f32 %v309, %v269
    %vm311 = vcmp.ge.s32.totalorder %v133, 11
    %v312 = vsel %vm311, %v310, 0.0
    %s313 = sld [smem:[#allocation4 + $0x4]]
    %314 = vrot.lane.b32.xlu0 %v312, 1
    %v315 = vpop.permute.xlu0 %314
    %v316 = vsel %vm136, %v315, 0.0
    %v317 = vstv %s313
    %v318 = vmul.f32 %v317, %v316
    %s319 = sld [smem:[#allocation6 + $0x4]]
    %v320 = vstv %s319
    %v321 = vmul.f32 %v320, %v312
    %v322 = vadd.f32 %v318, %v321
    %v323 = vand.u32 2147483647, %v322
    %v324 = vsub.f32 0.0, %v323
    %v325 = vmul.f32 %v324, 1.442695
    %v326 = vpow.pop %v325
    %v327 = vmul.f32 %v326, %v326
    %v328 = vadd.f32 %v327, 1.0
    %v329 = vrcp.pop %v328
    %v330 = vmul.f32 %v328, %v329
    %v331 = vsub.f32 2.0, %v330
    %v332 = vmul.f32 %v329, %v331
    %v333 = vsub.f32 1.0, %v326
    %vm334 = vcmp.ge.f32.partialorder %v322, 0.0
    %v335 = vsub.f32 0.0, %v326
    %v336 = vsel %vm334, 1.0, %v335
    %v337 = vmul.f32 %v333, %v336
    %v338 = vmul.f32 %v337, %v332
    %s339 = sld [smem:[#allocation10 + $0x4]]
    %v340 = vstv %s339
    %v341 = vmul.f32 %v340, %v338
    %s342 = sld [smem:[#allocation12 + $0x4]]
    %v343 = vstv %s342
    %v344 = vadd.f32 %v341, %v343
    %v345 = vadd.f32 %v303, %v344
    %s346 = sld [smem:[#allocation7 + $0x4]]
    %v347 = vstv %s346
    %v348 = vmul.f32 %v347, %v338
    %s349 = sld [smem:[#allocation9 + $0x4]]
    %v350 = vstv %s349
    %v351 = vadd.f32 %v348, %v350
    %v352 = vadd.f32 %v351, %v312
    %v353 = vsel %vm311, %v352, 0.0
    %s354 = sld [smem:[#allocation4 + $0x5]]
    %355 = vrot.lane.b32.xlu0 %v353, 2
    %v356 = vpop.permute.xlu0 %355
    %v357 = vsel %vm187, %v356, 0.0
    %v358 = vstv %s354
    %v359 = vmul.f32 %v358, %v357
    %s360 = sld [smem:[#allocation6 + $0x5]]
    %v361 = vstv %s360
    %v362 = vmul.f32 %v361, %v353
    %v363 = vadd.f32 %v359, %v362
    %v364 = vand.u32 2147483647, %v363
    %v365 = vsub.f32 0.0, %v364
    %v366 = vmul.f32 %v365, 1.442695
    %v367 = vpow.pop %v366
    %v368 = vmul.f32 %v367, %v367
    %v369 = vadd.f32 %v368, 1.0
    %v370 = vrcp.pop %v369
    %v371 = vmul.f32 %v369, %v370
    %v372 = vsub.f32 2.0, %v371
    %v373 = vmul.f32 %v370, %v372
    %v374 = vsub.f32 1.0, %v367
    %vm375 = vcmp.ge.f32.partialorder %v363, 0.0
    %v376 = vsub.f32 0.0, %v367
    %v377 = vsel %vm375, 1.0, %v376
    %v378 = vmul.f32 %v374, %v377
    %v379 = vmul.f32 %v378, %v373
    %s380 = sld [smem:[#allocation10 + $0x5]]
    %v381 = vstv %s380
    %v382 = vmul.f32 %v381, %v379
    %s383 = sld [smem:[#allocation12 + $0x5]]
    %v384 = vstv %s383
    %v385 = vadd.f32 %v382, %v384
    %v386 = vadd.f32 %v345, %v385
    %s387 = sld [smem:[#allocation7 + $0x5]]
    %v388 = vstv %s387
    %v389 = vmul.f32 %v388, %v379
    %s390 = sld [smem:[#allocation9 + $0x5]]
    %v391 = vstv %s390
    %v392 = vadd.f32 %v389, %v391
    %v393 = vadd.f32 %v392, %v353
    %vm394 = vcmp.ge.s32.totalorder %v133, 12
    %v395 = vsel %vm394, %v393, 0.0
    %s396 = sld [smem:[#allocation4 + $0x6]]
    %397 = vrot.lane.b32.xlu0 %v395, 4
    %v398 = vpop.permute.xlu0 %397
    %v399 = vsel %vm229, %v398, 0.0
    %v400 = vstv %s396
    %v401 = vmul.f32 %v400, %v399
    %s402 = sld [smem:[#allocation6 + $0x6]]
    %v403 = vstv %s402
    %v404 = vmul.f32 %v403, %v395
    %v405 = vadd.f32 %v401, %v404
    %v406 = vand.u32 2147483647, %v405
    %v407 = vsub.f32 0.0, %v406
    %v408 = vmul.f32 %v407, 1.442695
    %v409 = vpow.pop %v408
    %v410 = vmul.f32 %v409, %v409
    %v411 = vadd.f32 %v410, 1.0
    %v412 = vrcp.pop %v411
    %v413 = vmul.f32 %v411, %v412
    %v414 = vsub.f32 2.0, %v413
    %v415 = vmul.f32 %v412, %v414
    %v416 = vsub.f32 1.0, %v409
    %vm417 = vcmp.ge.f32.partialorder %v405, 0.0
    %v418 = vsub.f32 0.0, %v409
    %v419 = vsel %vm417, 1.0, %v418
    %v420 = vmul.f32 %v416, %v419
    %v421 = vmul.f32 %v420, %v415
    %s422 = sld [smem:[#allocation10 + $0x6]]
    %v423 = vstv %s422
    %v424 = vmul.f32 %v423, %v421
    %s425 = sld [smem:[#allocation12 + $0x6]]
    %v426 = vstv %s425
    %v427 = vadd.f32 %v424, %v426
    %v428 = vadd.f32 %v386, %v427
    %s429 = sld [smem:[#allocation7 + $0x6]]
    %v430 = vstv %s429
    %v431 = vmul.f32 %v430, %v421
    %s432 = sld [smem:[#allocation9 + $0x6]]
    %v433 = vstv %s432
    %v434 = vadd.f32 %v431, %v433
    %v435 = vadd.f32 %v434, %v395
    %vm436 = vcmp.ge.s32.totalorder %v133, 15
    %v437 = vsel %vm436, %v435, 0.0
    %s438 = sld [smem:[#allocation4 + $0x7]]
    %439 = vrot.lane.b32.xlu0 %v437, 8
    %v440 = vpop.permute.xlu0 %439
    %v441 = vsel %vm271, %v440, 0.0
    %v442 = vstv %s438
    %v443 = vmul.f32 %v442, %v441
    %s444 = sld [smem:[#allocation6 + $0x7]]
    %v445 = vstv %s444
    %v446 = vmul.f32 %v445, %v437
    %v447 = vadd.f32 %v443, %v446
    %v448 = vand.u32 2147483647, %v447
    %v449 = vsub.f32 0.0, %v448
    %v450 = vmul.f32 %v449, 1.442695
    %v451 = vpow.pop %v450
    %v452 = vmul.f32 %v451, %v451
    %v453 = vadd.f32 %v452, 1.0
    %v454 = vrcp.pop %v453
    %v455 = vmul.f32 %v453, %v454
    %v456 = vsub.f32 2.0, %v455
    %v457 = vmul.f32 %v454, %v456
    %v458 = vsub.f32 1.0, %v451
    %vm459 = vcmp.ge.f32.partialorder %v447, 0.0
    %v460 = vsub.f32 0.0, %v451
    %v461 = vsel %vm459, 1.0, %v460
    %v462 = vmul.f32 %v458, %v461
    %v463 = vmul.f32 %v462, %v457
    %s464 = sld [smem:[#allocation10 + $0x7]]
    %v465 = vstv %s464
    %v466 = vmul.f32 %v465, %v463
    %s467 = sld [smem:[#allocation12 + $0x7]]
    %v468 = vstv %s467
    %v469 = vadd.f32 %v466, %v468
    %v470 = vadd.f32 %v428, %v469
    %s471 = sld [smem:[#allocation7 + $0x7]]
    %v472 = vstv %s471
    %v473 = vmul.f32 %v472, %v463
    %s474 = sld [smem:[#allocation9 + $0x7]]
    %v475 = vstv %s474
    %v476 = vadd.f32 %v473, %v475
    %v477 = vadd.f32 %v476, %v437
    %vm478 = vcmp.ge.s32.totalorder %v133, 22
    %v479 = vsel %vm478, %v477, 0.0
    %s480 = sld [smem:[#allocation4 + $0x8]]
    %481 = vrot.lane.b32.xlu0 %v479, 1
    %v482 = vpop.permute.xlu0 %481
    %v483 = vsel %vm136, %v482, 0.0
    %v484 = vstv %s480
    %v485 = vmul.f32 %v484, %v483
    %s486 = sld [smem:[#allocation6 + $0x8]]
    %v487 = vstv %s486
    %v488 = vmul.f32 %v487, %v479
    %v489 = vadd.f32 %v485, %v488
    %v490 = vand.u32 2147483647, %v489
    %v491 = vsub.f32 0.0, %v490
    %v492 = vmul.f32 %v491, 1.442695
    %v493 = vpow.pop %v492
    %v494 = vmul.f32 %v493, %v493
    %v495 = vadd.f32 %v494, 1.0
    %v496 = vrcp.pop %v495
    %v497 = vmul.f32 %v495, %v496
    %v498 = vsub.f32 2.0, %v497
    %v499 = vmul.f32 %v496, %v498
    %v500 = vsub.f32 1.0, %v493
    %vm501 = vcmp.ge.f32.partialorder %v489, 0.0
    %v502 = vsub.f32 0.0, %v493
    %v503 = vsel %vm501, 1.0, %v502
    %v504 = vmul.f32 %v500, %v503
    %v505 = vmul.f32 %v504, %v499
    %s506 = sld [smem:[#allocation10 + $0x8]]
    %v507 = vstv %s506
    %v508 = vmul.f32 %v507, %v505
    %s509 = sld [smem:[#allocation12 + $0x8]]
    %v510 = vstv %s509
    %v511 = vadd.f32 %v508, %v510
    %v512 = vadd.f32 %v470, %v511
    %s513 = sld [smem:[#allocation7 + $0x8]]
    %v514 = vstv %s513
    %v515 = vmul.f32 %v514, %v505
    %s516 = sld [smem:[#allocation9 + $0x8]]
    %v517 = vstv %s516
    %v518 = vadd.f32 %v515, %v517
    %v519 = vadd.f32 %v518, %v479
    %v520 = vsel %vm478, %v519, 0.0
    %s521 = sld [smem:[#allocation4 + $0x9]]
    %522 = vrot.lane.b32.xlu0 %v520, 2
    %v523 = vpop.permute.xlu0 %522
    %v524 = vsel %vm187, %v523, 0.0
    %v525 = vstv %s521
    %v526 = vmul.f32 %v525, %v524
    %s527 = sld [smem:[#allocation6 + $0x9]]
    %v528 = vstv %s527
    %v529 = vmul.f32 %v528, %v520
    %v530 = vadd.f32 %v526, %v529
    %v531 = vand.u32 2147483647, %v530
    %v532 = vsub.f32 0.0, %v531
    %v533 = vmul.f32 %v532, 1.442695
    %v534 = vpow.pop %v533
    %v535 = vmul.f32 %v534, %v534
    %v536 = vadd.f32 %v535, 1.0
    %v537 = vrcp.pop %v536
    %v538 = vmul.f32 %v536, %v537
    %v539 = vsub.f32 2.0, %v538
    %v540 = vmul.f32 %v537, %v539
    %v541 = vsub.f32 1.0, %v534
    %vm542 = vcmp.ge.f32.partialorder %v530, 0.0
    %v543 = vsub.f32 0.0, %v534
    %v544 = vsel %vm542, 1.0, %v543
    %v545 = vmul.f32 %v541, %v544
    %v546 = vmul.f32 %v545, %v540
    %s547 = sld [smem:[#allocation10 + $0x9]]
    %v548 = vstv %s547
    %v549 = vmul.f32 %v548, %v546
    %s550 = sld [smem:[#allocation12 + $0x9]]
    %v551 = vstv %s550
    %v552 = vadd.f32 %v549, %v551
    %v553 = vadd.f32 %v512, %v552
    %s554 = sld [smem:[#allocation7 + $0x9]]
    %v555 = vstv %s554
    %v556 = vmul.f32 %v555, %v546
    %s557 = sld [smem:[#allocation9 + $0x9]]
    %v558 = vstv %s557
    %v559 = vadd.f32 %v556, %v558
    %v560 = vadd.f32 %v559, %v520
    %vm561 = vcmp.ge.s32.totalorder %v133, 23
    %v562 = vsel %vm561, %v560, 0.0
    %s563 = sld [smem:[#allocation4 + $0xa]]
    %564 = vrot.lane.b32.xlu0 %v562, 4
    %v565 = vpop.permute.xlu0 %564
    %v566 = vsel %vm229, %v565, 0.0
    %v567 = vstv %s563
    %v568 = vmul.f32 %v567, %v566
    %s569 = sld [smem:[#allocation6 + $0xa]]
    %v570 = vstv %s569
    %v571 = vmul.f32 %v570, %v562
    %v572 = vadd.f32 %v568, %v571
    %v573 = vand.u32 2147483647, %v572
    %v574 = vsub.f32 0.0, %v573
    %v575 = vmul.f32 %v574, 1.442695
    %v576 = vpow.pop %v575
    %v577 = vmul.f32 %v576, %v576
    %v578 = vadd.f32 %v577, 1.0
    %v579 = vrcp.pop %v578
    %v580 = vmul.f32 %v578, %v579
    %v581 = vsub.f32 2.0, %v580
    %v582 = vmul.f32 %v579, %v581
    %v583 = vsub.f32 1.0, %v576
    %vm584 = vcmp.ge.f32.partialorder %v572, 0.0
    %v585 = vsub.f32 0.0, %v576
    %v586 = vsel %vm584, 1.0, %v585
    %v587 = vmul.f32 %v583, %v586
    %v588 = vmul.f32 %v587, %v582
    %s589 = sld [smem:[#allocation10 + $0xa]]
    %v590 = vstv %s589
    %v591 = vmul.f32 %v590, %v588
    %s592 = sld [smem:[#allocation12 + $0xa]]
    %v593 = vstv %s592
    %v594 = vadd.f32 %v591, %v593
    %v595 = vadd.f32 %v553, %v594
    %s596 = sld [smem:[#allocation7 + $0xa]]
    %v597 = vstv %s596
    %v598 = vmul.f32 %v597, %v588
    %s599 = sld [smem:[#allocation9 + $0xa]]
    %v600 = vstv %s599
    %v601 = vadd.f32 %v598, %v600
    %v602 = vadd.f32 %v601, %v562
    %vm603 = vcmp.ge.s32.totalorder %v133, 26
    %v604 = vsel %vm603, %v602, 0.0
    %s605 = sld [smem:[#allocation4 + $0xb]]
    %606 = vrot.lane.b32.xlu0 %v604, 8
    %v607 = vpop.permute.xlu0 %606
    %v608 = vsel %vm271, %v607, 0.0
    %v609 = vstv %s605
    %v610 = vmul.f32 %v609, %v608
    %s611 = sld [smem:[#allocation6 + $0xb]]
    %v612 = vstv %s611
    %v613 = vmul.f32 %v612, %v604
    %v614 = vadd.f32 %v610, %v613
    %v615 = vand.u32 2147483647, %v614
    %v616 = vsub.f32 0.0, %v615
    %v617 = vmul.f32 %v616, 1.442695
    %v618 = vpow.pop %v617
    %v619 = vmul.f32 %v618, %v618
    %v620 = vadd.f32 %v619, 1.0
    %v621 = vrcp.pop %v620
    %v622 = vmul.f32 %v620, %v621
    %v623 = vsub.f32 2.0, %v622
    %v624 = vmul.f32 %v621, %v623
    %v625 = vsub.f32 1.0, %v618
    %vm626 = vcmp.ge.f32.partialorder %v614, 0.0
    %v627 = vsub.f32 0.0, %v618
    %v628 = vsel %vm626, 1.0, %v627
    %v629 = vmul.f32 %v625, %v628
    %v630 = vmul.f32 %v629, %v624
    %s631 = sld [smem:[#allocation10 + $0xb]]
    %v632 = vstv %s631
    %v633 = vmul.f32 %v632, %v630
    %s634 = sld [smem:[#allocation12 + $0xb]]
    %v635 = vstv %s634
    %v636 = vadd.f32 %v633, %v635
    %v637 = vadd.f32 %v595, %v636
    %v638 = vmax.f32 %v637, 0.0
    %s639 = sld [smem:[#allocation13]]
    %v640 = vstv %s639
    %v641 = vmul.f32 %v640, %v638
    %v642 = vmax.f32 %v641, 0.0
    %s643 = sld [smem:[#allocation13 + $0x1]]
    %v644 = vstv %s643
    %v645 = vmul.f32 %v644, %v642
    %vm646 = vcmp.ge.s32.totalorder %v133, 45
    %v647 = vmul.f32 %v645, 0.0
    %v648 = vadd.f32 %v647, 1.0
    %v649 = vsel %vm646, %v648, 0.0
    %v650 = vld [vmem:[%s9] sm:$0xff]
    %v651 = vld [vmem:[%s9 + $0x8] sm:$0xff]
    %v652 = vld [vmem:[%s9 + $0x10] sm:$0xff]
    %v653 = vld [vmem:[%s9 + $0x18] sm:$0xff]
    %v654 = vld [vmem:[%s9 + $0x20] sm:$0xff]
    %v655 = vld [vmem:[%s9 + $0x28] sm:$0xff]
    %v656 = vld [vmem:[%s9 + $0x30] sm:$0xff]
    %v657 = vld [vmem:[%s9 + $0x38] sm:$0xff]
    %v658 = vld [vmem:[%s9 + $0x40] sm:$0xff]
    %v659 = vld [vmem:[%s9 + $0x48] sm:$0xff]
    %v660 = vld [vmem:[%s9 + $0x50] sm:$0xff]
    %v661 = vld [vmem:[%s9 + $0x58] sm:$0xff]
    %v662 = vld [vmem:[%s9 + $0x60] sm:$0xff]
    %v663 = vld [vmem:[%s9 + $0x68] sm:$0xff]
    %v664 = vld [vmem:[%s9 + $0x70] sm:$0xff]
    %v665 = vld [vmem:[%s9 + $0x78] sm:$0xff]
    %v666 = vld [vmem:[%s10] sm:$0x1]
    %v668 = vlaneseq
    %v669 = vshrl.u32 %v668, 7
    %v670 = vsub.s32 0, %v669
    %v671 = vrot.slane %v666, %v670
    %673 = vmatprep.subr.mxu0 0.0
    %674 = vmatpush1.msra.mxu0 %v650
    %675 = vmatprep.subr.mxu0 0.0
    %676 = vmatpush1.msra.mxu0 %v651
    %677 = vmatprep.subr.mxu0 0.0
    %678 = vmatpush1.msra.mxu0 %v652
    %679 = vmatprep.subr.mxu0 0.0
    %680 = vmatpush1.msra.mxu0 %v653
    %681 = vmatprep.subr.mxu0 0.0
    %682 = vmatpush1.msra.mxu0 %v654
    %683 = vmatprep.subr.mxu0 0.0
    %684 = vmatpush1.msra.mxu0 %v655
    %685 = vmatprep.subr.mxu0 0.0
    %686 = vmatpush1.msra.mxu0 %v656
    %687 = vmatprep.subr.mxu0 0.0
    %688 = vmatpush1.msra.mxu0 %v657
    %689 = vmatprep.subr.mxu0 0.0
    %690 = vmatpush1.msra.mxu0 %v658
    %691 = vmatprep.subr.mxu0 0.0
    %692 = vmatpush1.msra.mxu0 %v659
    %693 = vmatprep.subr.mxu0 0.0
    %694 = vmatpush1.msra.mxu0 %v660
    %695 = vmatprep.subr.mxu0 0.0
    %696 = vmatpush1.msra.mxu0 %v661
    %697 = vmatprep.subr.mxu0 0.0
    %698 = vmatpush1.msra.mxu0 %v662
    %699 = vmatprep.subr.mxu0 0.0
    %700 = vmatpush1.msra.mxu0 %v663
    %701 = vmatprep.subr.mxu0 0.0
    %702 = vmatpush1.msra.mxu0 %v664
    %703 = vmatprep.subr.mxu0 0.0
    %704 = vmatpush1.msra.mxu0 %v665
    %705 = vmatprep.subr.mxu0 0.0
    %706 = vmatpush1.msra.mxu0 0.0
    %707 = vmatprep.subr.mxu0 0.0
    %708 = vmatpush1.msra.mxu0 0.0
    %709 = vmatprep.subr.mxu0 0.0
    %710 = vmatpush1.msra.mxu0 0.0
    %711 = vmatprep.subr.mxu0 0.0
    %712 = vmatpush1.msra.mxu0 0.0
    %713 = vmatprep.subr.mxu0 0.0
    %714 = vmatpush1.msra.mxu0 0.0
    %715 = vmatprep.subr.mxu0 0.0
    %716 = vmatpush1.msra.mxu0 0.0
    %717 = vmatprep.subr.mxu0 0.0
    %718 = vmatpush1.msra.mxu0 0.0
    %719 = vmatprep.subr.mxu0 0.0
    %720 = vmatpush1.msra.mxu0 0.0
    %721 = vmatprep.subr.mxu0 0.0
    %722 = vmatpush1.msra.mxu0 0.0
    %723 = vmatprep.subr.mxu0 0.0
    %724 = vmatpush1.msra.mxu0 0.0
    %725 = vmatprep.subr.mxu0 0.0
    %726 = vmatpush1.msra.mxu0 0.0
    %727 = vmatprep.subr.mxu0 0.0
    %728 = vmatpush1.msra.mxu0 0.0
    %729 = vmatprep.subr.mxu0 0.0
    %730 = vmatpush1.msra.mxu0 0.0
    %731 = vmatprep.subr.mxu0 0.0
    %732 = vmatpush1.msra.mxu0 0.0
    %733 = vmatprep.subr.mxu0 0.0
    %734 = vmatpush1.msra.mxu0 0.0
    %735 = vmatprep.subr.mxu0 0.0
    %736 = vmatpush1.msra.mxu0 0.0
    %737 = vmatprep.mubr.f32.mxu0 0.0
    %738 = vmatmul.mubr.f32.gmra.mrb[0].mxu0 %v649
    %v739 = vpop.f32.mrb[0].mxu0
    %v740 = vadd.f32 %v671, %v739
    %v741 = vpop.f32.mrb[0].mxu0
    %742 = vdwg.mxu0
    %743 = vst [vmem:[%s11] sm:$0xff] %v740
    // Predicated region
    $region78: #{wavenet_classifier_forward.1} parent=1 // pred_check
      _
    $region79: #{wavenet_classifier_forward.1} parent=1 // pred_check_branch
      %745 = sbr.rel (0) target = $region81
    $region80: #{wavenet_classifier_forward.1} parent=1 // pred_region
      _
    $region81: #{wavenet_classifier_forward.1} parent=1 // pred_fallthru
      _
    // Predicated region
    $region82: #{wavenet_classifier_forward.1} parent=1 // pred_check
      _
    $region83: #{wavenet_classifier_forward.1} parent=1 // pred_check_branch
      %747 = sbr.rel (0) target = $region85
    $region84: #{wavenet_classifier_forward.1} parent=1 // pred_region
      _
    $region85: #{wavenet_classifier_forward.1} parent=1 // pred_fallthru
      _
    %748 = vsyncpa [#allocation3], 1
    %749 = vsyncpa [#allocation5], 1
    %750 = vsyncpa [#allocation8], 1
    %751 = vsyncpa [#allocation11], 1
    %752 = vsyncpa [#allocation14], 1

</llo_original>
